<compile_context>
chip_gen: v5e
topology: v5e:2x2
jax: 0.10.0
libtpu: 0.0.40
codegen_flags: <defaults>
</compile_context>

<pallas_src>
import math
import functools

import jax
import jax.numpy as jnp
from jax.experimental import pallas as pl
from jax.experimental.pallas import tpu as pltpu

_VMEM_LIMIT = 32 * 1024 * 1024  # raise v5e's 16 MiB scoped default; <= physical on all gens


# ---------------------------------------------------------------------------
# Kernels 1 & 3: tiled linear projection  y = x @ W + b   (W shipped as bf16)
# ---------------------------------------------------------------------------
def _linear_kernel(x_ref, w_ref, b_ref, o_ref):
    x = x_ref[...].astype(jnp.bfloat16)                      # (ts, H_in)
    y = jnp.dot(x, w_ref[...], preferred_element_type=jnp.float32)
    o_ref[...] = (y + b_ref[0]).astype(o_ref.dtype)          # (ts, H_out)


def _linear(x, w_bf16, b, *, tile_s):
    B, S, H_in = x.shape
    H_out = w_bf16.shape[1]
    return pl.pallas_call(
        _linear_kernel,
        out_shape=jax.ShapeDtypeStruct((B, S, H_out), x.dtype),
        grid_spec=pltpu.PrefetchScalarGridSpec(
            num_scalar_prefetch=0,
            grid=(B, S // tile_s),
            in_specs=[
                pl.BlockSpec((pl.Squeezed(), tile_s, H_in), lambda b, s: (b, s, 0)),
                pl.BlockSpec((H_in, H_out), lambda b, s: (0, 0)),
                pl.BlockSpec((1, H_out), lambda b, s: (0, 0)),
            ],
            out_specs=pl.BlockSpec((pl.Squeezed(), tile_s, H_out),
                                   lambda b, s: (b, s, 0)),
        ),
        compiler_params=pltpu.CompilerParams(
            dimension_semantics=("parallel", "parallel"),
            vmem_limit_bytes=_VMEM_LIMIT),
        cost_estimate=pl.CostEstimate(
            flops=2 * B * S * H_in * H_out,
            transcendentals=0,
            bytes_accessed=4 * B * S * (H_in + H_out) + 2 * H_in * H_out),
    )(x, w_bf16, b)


# ---------------------------------------------------------------------------
# Kernel 2: flash attention (online softmax), heads batched in the leading dim
# ---------------------------------------------------------------------------
def _flash_kernel(scale, q_ref, k_ref, v_ref, ctx_ref, m_sc, l_sc, acc_sc):
    ki = pl.program_id(2)

    @pl.when(ki == 0)
    def _():
        m_sc[...] = jnp.full_like(m_sc, -jnp.inf)
        l_sc[...] = jnp.zeros_like(l_sc)
        acc_sc[...] = jnp.zeros_like(acc_sc)

    # Fold the 1/sqrt(d) scale into q (f32), then feed the MXU bf16 operands.
    q = (q_ref[...] * scale).astype(jnp.bfloat16)            # (nh, tq, d)
    k = k_ref[...].astype(jnp.bfloat16)                      # (nh, tk, d)
    v = v_ref[...].astype(jnp.bfloat16)                      # (nh, tk, d)

    # Contraction on the last dim of both operands -> no kh.T relayout.
    s = jnp.einsum("hqd,hkd->hqk", q, k,
                   preferred_element_type=jnp.float32)       # (nh, tq, tk)

    m_prev = m_sc[...]
    m_new = jnp.maximum(m_prev, s.max(axis=-1, keepdims=True))
    alpha = jnp.exp(m_prev - m_new)                          # f32 softmax path
    p = jnp.exp(s - m_new)
    l_sc[...] = alpha * l_sc[...] + p.sum(axis=-1, keepdims=True)
    acc_sc[...] = alpha * acc_sc[...] + jnp.einsum(
        "hqk,hkd->hqd", p.astype(jnp.bfloat16), v,
        preferred_element_type=jnp.float32)
    m_sc[...] = m_new

    @pl.when(ki == pl.num_programs(2) - 1)
    def _():
        # Deferred normalization: one reciprocal-multiply on the (nh, tq, d) context.
        inv_l = pl.reciprocal(l_sc[...], approx=True)
        ctx_ref[...] = (acc_sc[...] * inv_l).astype(ctx_ref.dtype)


def _flash_attention(q, k, v, *, tile_q, tile_k):
    B, nh, S, d = q.shape
    scale = 1.0 / math.sqrt(d)

    q_map = lambda b, qi, ki: (b, 0, qi, 0)
    kv_map = lambda b, qi, ki: (b, 0, ki, 0)
    q_spec = pl.BlockSpec((pl.Squeezed(), nh, tile_q, d), q_map)
    kv_spec = pl.BlockSpec((pl.Squeezed(), nh, tile_k, d), kv_map)
    out_spec = pl.BlockSpec((pl.Squeezed(), nh, tile_q, d), q_map)

    return pl.pallas_call(
        functools.partial(_flash_kernel, scale),
        out_shape=jax.ShapeDtypeStruct((B, nh, S, d), q.dtype),
        grid_spec=pltpu.PrefetchScalarGridSpec(
            num_scalar_prefetch=0,
            grid=(B, S // tile_q, S // tile_k),
            in_specs=[q_spec, kv_spec, kv_spec],
            out_specs=out_spec,
            scratch_shapes=[
                pltpu.VMEM((nh, tile_q, 1), jnp.float32),    # running max m
                pltpu.VMEM((nh, tile_q, 1), jnp.float32),    # running denom l
                pltpu.VMEM((nh, tile_q, d), jnp.float32),    # unnormalized context
            ],
        ),
        compiler_params=pltpu.CompilerParams(
            dimension_semantics=("parallel", "parallel", "arbitrary"),
            vmem_limit_bytes=_VMEM_LIMIT),
        cost_estimate=pl.CostEstimate(
            flops=4 * B * nh * S * S * d,
            transcendentals=B * nh * S * S,
            bytes_accessed=4 * 4 * B * nh * S * d),
    )(q, k, v)


# ---------------------------------------------------------------------------
# Full forward pass (mirrors torch `Attention.forward`)
# ---------------------------------------------------------------------------
def attention_forward(x, params, num_heads):
    """x: [B, S, H] float32.  params: dict of f32 weights/biases (see init_params)."""
    B, S, H = x.shape
    assert H % num_heads == 0
    d = H // num_heads

    # Sequence tile: 256 for big (v6e-friendly) sequences, else the whole sequence.
    tile = 256 if S % 256 == 0 else S

    # Fuse Wq/Wk/Wv into one [H, 3H] matmul; ship weights as bf16 (f32 accumulation).
    wqkv = jnp.concatenate([params["wq"], params["wk"], params["wv"]], axis=1)
    bqkv = jnp.concatenate([params["bq"], params["bk"], params["bv"]], axis=1)
    wqkv = wqkv.astype(jnp.bfloat16)
    wo = params["wo"].astype(jnp.bfloat16)
    bo = params["bo"]

    qkv = _linear(x, wqkv, bqkv, tile_s=tile)                # (B, S, 3H)
    q, k, v = jnp.split(qkv, 3, axis=-1)                     # each (B, S, H)

    def to_heads(t):                                         # XLA layout plumbing
        return t.reshape(B, S, num_heads, d).transpose(0, 2, 1, 3)

    ctx = _flash_attention(to_heads(q), to_heads(k), to_heads(v),
                           tile_q=tile, tile_k=tile)         # (B, nh, S, d)
    ctx = ctx.transpose(0, 2, 1, 3).reshape(B, S, H)         # merge heads (XLA)

    return _linear(ctx, wo, bo, tile_s=tile)                 # (B, S, H)


# ---------------------------------------------------------------------------
# Synthetic parameters + plain-JAX f32 reference
# ---------------------------------------------------------------------------
def init_params(key, hidden_size):
    """Weights stored as [H_in, H_out] (y = x @ W + b, i.e. W = W_torch.T)."""
    ks = jax.random.split(key, 8)
    s = 1.0 / math.sqrt(hidden_size)
    def w(k):
        return jax.random.normal(k, (hidden_size, hidden_size), jnp.float32) * s
    def b(k):
        return jax.random.normal(k, (1, hidden_size), jnp.float32) * s
    return {
        "wq": w(ks[0]), "bq": b(ks[1]),
        "wk": w(ks[2]), "bk": b(ks[3]),
        "wv": w(ks[4]), "bv": b(ks[5]),
        "wo": w(ks[6]), "bo": b(ks[7]),
    }


def reference_forward(x, params, num_heads):
    B, S, H = x.shape
    d = H // num_heads
    q = x @ params["wq"] + params["bq"][0]
    k = x @ params["wk"] + params["bk"][0]
    v = x @ params["wv"] + params["bv"][0]
    def split(t):
        return t.reshape(B, S, num_heads, d).transpose(0, 2, 1, 3)
    q, k, v = split(q), split(k), split(v)
    scores = jnp.einsum("bhqd,bhkd->bhqk", q, k) / math.sqrt(d)
    probs = jax.nn.softmax(scores, axis=-1)
    ctx = jnp.einsum("bhqk,bhkd->bhqd", probs, v)
    ctx = ctx.transpose(0, 2, 1, 3).reshape(B, S, H)
    return ctx @ params["wo"] + params["bo"][0]


if __name__ == "__main__":
    B, S, H = 2, 8, 32
    num_heads = 4

    key = jax.random.PRNGKey(0)
    k_x, k_p = jax.random.split(key)
    x = jax.random.normal(k_x, (B, S, H), jnp.float32)
    params = init_params(k_p, H)

    fwd = jax.jit(lambda xx: attention_forward(xx, params, num_heads))
    out = jax.block_until_ready(fwd(x))

    ref = reference_forward(x, params, num_heads)
    assert out.shape == (B, S, H)
    # bf16 MXU operands + bf16 weights -> loosened tolerance vs f32 reference.
    assert jnp.allclose(out, ref, atol=1e-1, rtol=1e-1), float(jnp.max(jnp.abs(out - ref)))

    print("KERNEL_OK")
</pallas_src>

<mosaic_0001>
module attributes {stable_mosaic.version = 11 : i64} {
  func.func @_linear_kernel(%arg0: i32, %arg1: i32, %arg2: memref<1x8x32xf32, #tpu.memory_space<vmem>>, %arg3: memref<32x96xbf16, #tpu.memory_space<vmem>>, %arg4: memref<1x96xf32, #tpu.memory_space<vmem>>, %arg5: memref<1x8x96xf32, #tpu.memory_space<vmem>>) attributes {dimension_semantics = [#tpu.dimension_semantics<parallel>, #tpu.dimension_semantics<parallel>], iteration_bounds = array<i64: 2, 1>, scalar_prefetch = 0 : i64, scratch_operands = 0 : i64, tpu.core_type = #tpu.core_type<tc>, window_params = [{transform_indices = @transform_0, window_bounds = array<i64: 1, 8, 32>}, {pipeline_mode = #tpu.pipeline_mode<synchronous>, transform_indices = @transform_1, window_bounds = array<i64: 32, 96>}, {pipeline_mode = #tpu.pipeline_mode<synchronous>, transform_indices = @transform_2, window_bounds = array<i64: 1, 96>}, {transform_indices = @transform_3, window_bounds = array<i64: 1, 8, 96>}]} {
    %c0 = arith.constant 0 : index
    %c0_0 = arith.constant 0 : index
    %c0_1 = arith.constant 0 : index
    %0 = vector.load %arg2[%c0, %c0_0, %c0_1] : memref<1x8x32xf32, #tpu.memory_space<vmem>>, vector<1x8x32xf32>
    %1 = vector.shape_cast %0 : vector<1x8x32xf32> to vector<8x32xf32>
    %2 = arith.truncf %1 : vector<8x32xf32> to vector<8x32xbf16>
    %c0_2 = arith.constant 0 : index
    %c0_3 = arith.constant 0 : index
    %3 = vector.load %arg3[%c0_2, %c0_3] : memref<32x96xbf16, #tpu.memory_space<vmem>>, vector<32x96xbf16>
    %cst = arith.constant dense<0.000000e+00> : vector<8x96xf32>
    %4 = tpu.matmul %2, %3, %cst {dimension_numbers = #tpu.dot_dimension_numbers<[1], [0], [0], [1], [0, 0, 1, 1], [], []>} : vector<8x32xbf16>, vector<32x96xbf16>, vector<8x96xf32> -> vector<8x96xf32>
    %c0_4 = arith.constant 0 : index
    %c0_5 = arith.constant 0 : index
    %5 = vector.load %arg4[%c0_4, %c0_5] : memref<1x96xf32, #tpu.memory_space<vmem>>, vector<1x96xf32>
    %6 = vector.shape_cast %5 : vector<1x96xf32> to vector<96xf32>
    %7 = vector.shape_cast %6 : vector<96xf32> to vector<1x96xf32>
    %8 = vector.broadcast %7 : vector<1x96xf32> to vector<8x96xf32>
    %9 = arith.addf %4, %8 : vector<8x96xf32>
    %c0_6 = arith.constant 0 : index
    %c0_7 = arith.constant 0 : index
    %c0_8 = arith.constant 0 : index
    %10 = vector.load %arg5[%c0_6, %c0_7, %c0_8] : memref<1x8x96xf32, #tpu.memory_space<vmem>>, vector<1x8x96xf32>
    %11 = vector.shape_cast %10 : vector<1x8x96xf32> to vector<8x96xf32>
    %12 = vector.shape_cast %9 : vector<8x96xf32> to vector<1x8x96xf32>
    tpu.vector_store %arg5[%c0_6, %c0_7, %c0_8], %12 {strides = array<i32>} : memref<1x8x96xf32, #tpu.memory_space<vmem>>, vector<1x8x96xf32>,
    return
  }
  func.func @transform_0(%arg0: i32, %arg1: i32) -> (i32, i32, i32) {
    %c0_i32 = arith.constant 0 : i32
    %c0_i32_0 = arith.constant 0 : i32
    return %arg0, %arg1, %c0_i32 : i32, i32, i32
  }
  func.func @transform_1(%arg0: i32, %arg1: i32) -> (i32, i32) {
    %c0_i32 = arith.constant 0 : i32
    %c0_i32_0 = arith.constant 0 : i32
    %c0_i32_1 = arith.constant 0 : i32
    return %c0_i32, %c0_i32_0 : i32, i32
  }
  func.func @transform_2(%arg0: i32, %arg1: i32) -> (i32, i32) {
    %c0_i32 = arith.constant 0 : i32
    %c0_i32_0 = arith.constant 0 : i32
    %c0_i32_1 = arith.constant 0 : i32
    return %c0_i32, %c0_i32_0 : i32, i32
  }
  func.func @transform_3(%arg0: i32, %arg1: i32) -> (i32, i32, i32) {
    %c0_i32 = arith.constant 0 : i32
    %c0_i32_0 = arith.constant 0 : i32
    return %arg0, %arg1, %c0_i32 : i32, i32, i32
  }
}

module attributes {stable_mosaic.version = 11 : i64} {
  func.func @_linear_kernel(%arg0: i32, %arg1: i32, %arg2: memref<1x8x32xf32, #tpu.memory_space<vmem>>, %arg3: memref<32x32xbf16, #tpu.memory_space<vmem>>, %arg4: memref<1x32xf32, #tpu.memory_space<vmem>>, %arg5: memref<1x8x32xf32, #tpu.memory_space<vmem>>) attributes {dimension_semantics = [#tpu.dimension_semantics<parallel>, #tpu.dimension_semantics<parallel>], iteration_bounds = array<i64: 2, 1>, scalar_prefetch = 0 : i64, scratch_operands = 0 : i64, tpu.core_type = #tpu.core_type<tc>, window_params = [{transform_indices = @transform_0, window_bounds = array<i64: 1, 8, 32>}, {pipeline_mode = #tpu.pipeline_mode<synchronous>, transform_indices = @transform_1, window_bounds = array<i64: 32, 32>}, {pipeline_mode = #tpu.pipeline_mode<synchronous>, transform_indices = @transform_2, window_bounds = array<i64: 1, 32>}, {transform_indices = @transform_3, window_bounds = array<i64: 1, 8, 32>}]} {
    %c0 = arith.constant 0 : index
    %c0_0 = arith.constant 0 : index
    %c0_1 = arith.constant 0 : index
    %0 = vector.load %arg2[%c0, %c0_0, %c0_1] : memref<1x8x32xf32, #tpu.memory_space<vmem>>, vector<1x8x32xf32>
    %1 = vector.shape_cast %0 : vector<1x8x32xf32> to vector<8x32xf32>
    %2 = arith.truncf %1 : vector<8x32xf32> to vector<8x32xbf16>
    %c0_2 = arith.constant 0 : index
    %c0_3 = arith.constant 0 : index
    %3 = vector.load %arg3[%c0_2, %c0_3] : memref<32x32xbf16, #tpu.memory_space<vmem>>, vector<32x32xbf16>
    %cst = arith.constant dense<0.000000e+00> : vector<8x32xf32>
    %4 = tpu.matmul %2, %3, %cst {dimension_numbers = #tpu.dot_dimension_numbers<[1], [0], [0], [1], [0, 0, 1, 1], [], []>} : vector<8x32xbf16>, vector<32x32xbf16>, vector<8x32xf32> -> vector<8x32xf32>
    %c0_4 = arith.constant 0 : index
    %c0_5 = arith.constant 0 : index
    %5 = vector.load %arg4[%c0_4, %c0_5] : memref<1x32xf32, #tpu.memory_space<vmem>>, vector<1x32xf32>
    %6 = vector.shape_cast %5 : vector<1x32xf32> to vector<32xf32>
    %7 = vector.shape_cast %6 : vector<32xf32> to vector<1x32xf32>
    %8 = vector.broadcast %7 : vector<1x32xf32> to vector<8x32xf32>
    %9 = arith.addf %4, %8 : vector<8x32xf32>
    %c0_6 = arith.constant 0 : index
    %c0_7 = arith.constant 0 : index
    %c0_8 = arith.constant 0 : index
    %10 = vector.load %arg5[%c0_6, %c0_7, %c0_8] : memref<1x8x32xf32, #tpu.memory_space<vmem>>, vector<1x8x32xf32>
    %11 = vector.shape_cast %10 : vector<1x8x32xf32> to vector<8x32xf32>
    %12 = vector.shape_cast %9 : vector<8x32xf32> to vector<1x8x32xf32>
    tpu.vector_store %arg5[%c0_6, %c0_7, %c0_8], %12 {strides = array<i32>} : memref<1x8x32xf32, #tpu.memory_space<vmem>>, vector<1x8x32xf32>,
    return
  }
  func.func @transform_0(%arg0: i32, %arg1: i32) -> (i32, i32, i32) {
    %c0_i32 = arith.constant 0 : i32
    %c0_i32_0 = arith.constant 0 : i32
    return %arg0, %arg1, %c0_i32 : i32, i32, i32
  }
  func.func @transform_1(%arg0: i32, %arg1: i32) -> (i32, i32) {
    %c0_i32 = arith.constant 0 : i32
    %c0_i32_0 = arith.constant 0 : i32
    %c0_i32_1 = arith.constant 0 : i32
    return %c0_i32, %c0_i32_0 : i32, i32
  }
  func.func @transform_2(%arg0: i32, %arg1: i32) -> (i32, i32) {
    %c0_i32 = arith.constant 0 : i32
    %c0_i32_0 = arith.constant 0 : i32
    %c0_i32_1 = arith.constant 0 : i32
    return %c0_i32, %c0_i32_0 : i32, i32
  }
  func.func @transform_3(%arg0: i32, %arg1: i32) -> (i32, i32, i32) {
    %c0_i32 = arith.constant 0 : i32
    %c0_i32_0 = arith.constant 0 : i32
    return %arg0, %arg1, %c0_i32 : i32, i32, i32
  }
}

module attributes {stable_mosaic.version = 11 : i64} {
  func.func @_flash_kernel(%arg0: i32, %arg1: i32, %arg2: i32, %arg3: memref<1x4x8x8xf32, #tpu.memory_space<vmem>>, %arg4: memref<1x4x8x8xf32, #tpu.memory_space<vmem>>, %arg5: memref<1x4x8x8xf32, #tpu.memory_space<vmem>>, %arg6: memref<1x4x8x8xf32, #tpu.memory_space<vmem>>, %arg7: memref<4x8x1xf32, #tpu.memory_space<vmem>>, %arg8: memref<4x8x1xf32, #tpu.memory_space<vmem>>, %arg9: memref<4x8x8xf32, #tpu.memory_space<vmem>>) attributes {dimension_semantics = [#tpu.dimension_semantics<parallel>, #tpu.dimension_semantics<parallel>, #tpu.dimension_semantics<arbitrary>], iteration_bounds = array<i64: 2, 1, 1>, scalar_prefetch = 0 : i64, scratch_operands = 3 : i64, tpu.core_type = #tpu.core_type<tc>, window_params = [{transform_indices = @transform_0, window_bounds = array<i64: 1, 4, 8, 8>}, {transform_indices = @transform_1, window_bounds = array<i64: 1, 4, 8, 8>}, {transform_indices = @transform_2, window_bounds = array<i64: 1, 4, 8, 8>}, {transform_indices = @transform_3, window_bounds = array<i64: 1, 4, 8, 8>}]} {
    %c0_i32 = arith.constant 0 : i32
    %0 = arith.cmpi eq, %arg2, %c0_i32 : i32
    %1 = arith.extui %0 : i1 to i32
    %c0_i32_0 = arith.constant 0 : i32
    %2 = arith.cmpi ne, %1, %c0_i32_0 : i32
    scf.if %2 {
      %cst_36 = arith.constant 0xFF800000 : f32
      %41 = vector.broadcast %cst_36 : f32 to vector<4x8x1xf32>
      %c0_37 = arith.constant 0 : index
      %c0_38 = arith.constant 0 : index
      %c0_39 = arith.constant 0 : index
      %42 = vector.load %arg7[%c0_37, %c0_38, %c0_39] : memref<4x8x1xf32, #tpu.memory_space<vmem>>, vector<4x8x1xf32>
      tpu.vector_store %arg7[%c0_37, %c0_38, %c0_39], %41 {strides = array<i32>} : memref<4x8x1xf32, #tpu.memory_space<vmem>>, vector<4x8x1xf32>,
      %cst_40 = arith.constant 0.000000e+00 : f32
      %43 = vector.broadcast %cst_40 : f32 to vector<4x8x1xf32>
      %c0_41 = arith.constant 0 : index
      %c0_42 = arith.constant 0 : index
      %c0_43 = arith.constant 0 : index
      %44 = vector.load %arg8[%c0_41, %c0_42, %c0_43] : memref<4x8x1xf32, #tpu.memory_space<vmem>>, vector<4x8x1xf32>
      tpu.vector_store %arg8[%c0_41, %c0_42, %c0_43], %43 {strides = array<i32>} : memref<4x8x1xf32, #tpu.memory_space<vmem>>, vector<4x8x1xf32>,
      %cst_44 = arith.constant 0.000000e+00 : f32
      %45 = vector.broadcast %cst_44 : f32 to vector<4x8x8xf32>
      %c0_45 = arith.constant 0 : index
      %c0_46 = arith.constant 0 : index
      %c0_47 = arith.constant 0 : index
      %46 = vector.load %arg9[%c0_45, %c0_46, %c0_47] : memref<4x8x8xf32, #tpu.memory_space<vmem>>, vector<4x8x8xf32>
      tpu.vector_store %arg9[%c0_45, %c0_46, %c0_47], %45 {strides = array<i32>} : memref<4x8x8xf32, #tpu.memory_space<vmem>>, vector<4x8x8xf32>,
    } else {
    }
    %c0 = arith.constant 0 : index
    %c0_1 = arith.constant 0 : index
    %c0_2 = arith.constant 0 : index
    %c0_3 = arith.constant 0 : index
    %3 = vector.load %arg3[%c0, %c0_1, %c0_2, %c0_3] : memref<1x4x8x8xf32, #tpu.memory_space<vmem>>, vector<1x4x8x8xf32>
    %4 = vector.shape_cast %3 : vector<1x4x8x8xf32> to vector<4x8x8xf32>
    %cst = arith.constant 0.353553385 : f32
    %5 = vector.broadcast %cst : f32 to vector<4x8x8xf32>
    %6 = arith.mulf %4, %5 : vector<4x8x8xf32>
    %7 = arith.truncf %6 : vector<4x8x8xf32> to vector<4x8x8xbf16>
    %c0_4 = arith.constant 0 : index
    %c0_5 = arith.constant 0 : index
    %c0_6 = arith.constant 0 : index
    %c0_7 = arith.constant 0 : index
    %8 = vector.load %arg4[%c0_4, %c0_5, %c0_6, %c0_7] : memref<1x4x8x8xf32, #tpu.memory_space<vmem>>, vector<1x4x8x8xf32>
    %9 = vector.shape_cast %8 : vector<1x4x8x8xf32> to vector<4x8x8xf32>
    %10 = arith.truncf %9 : vector<4x8x8xf32> to vector<4x8x8xbf16>
    %c0_8 = arith.constant 0 : index
    %c0_9 = arith.constant 0 : index
    %c0_10 = arith.constant 0 : index
    %c0_11 = arith.constant 0 : index
    %11 = vector.load %arg5[%c0_8, %c0_9, %c0_10, %c0_11] : memref<1x4x8x8xf32, #tpu.memory_space<vmem>>, vector<1x4x8x8xf32>
    %12 = vector.shape_cast %11 : vector<1x4x8x8xf32> to vector<4x8x8xf32>
    %13 = arith.truncf %12 : vector<4x8x8xf32> to vector<4x8x8xbf16>
    "tpu.trace_start"() <{level = 10 : i32, message = "hqd,hkd->hqk"}> : () -> ()
    %cst_12 = arith.constant dense<0.000000e+00> : vector<4x8x8xf32>
    %14 = tpu.matmul %7, %10, %cst_12 {dimension_numbers = #tpu.dot_dimension_numbers<[2], [2], [1], [1], [0, 0, 0, 1, 1, 1], [0], [0]>} : vector<4x8x8xbf16>, vector<4x8x8xbf16>, vector<4x8x8xf32> -> vector<4x8x8xf32>
    "tpu.trace_stop"() : () -> ()
    %c0_13 = arith.constant 0 : index
    %c0_14 = arith.constant 0 : index
    %c0_15 = arith.constant 0 : index
    %15 = vector.load %arg7[%c0_13, %c0_14, %c0_15] : memref<4x8x1xf32, #tpu.memory_space<vmem>>, vector<4x8x1xf32>
    %cst_16 = arith.constant dense<0xFF800000> : vector<4x8xf32>
    %16 = vector.multi_reduction <maximumf>, %14, %cst_16 [2] : vector<4x8x8xf32> to vector<4x8xf32>
    %17 = vector.shape_cast %16 : vector<4x8xf32> to vector<4x8x1xf32>
    %18 = arith.maximumf %15, %17 : vector<4x8x1xf32>
    %19 = arith.subf %15, %18 : vector<4x8x1xf32>
    %20 = math.exp %19 : vector<4x8x1xf32>
    %21 = vector.broadcast %18 : vector<4x8x1xf32> to vector<4x8x8xf32>
    %22 = arith.subf %14, %21 : vector<4x8x8xf32>
    %23 = math.exp %22 : vector<4x8x8xf32>
    %c0_17 = arith.constant 0 : index
    %c0_18 = arith.constant 0 : index
    %c0_19 = arith.constant 0 : index
    %24 = vector.load %arg8[%c0_17, %c0_18, %c0_19] : memref<4x8x1xf32, #tpu.memory_space<vmem>>, vector<4x8x1xf32>
    %25 = arith.mulf %20, %24 : vector<4x8x1xf32>
    %cst_20 = arith.constant dense<0.000000e+00> : vector<4x8xf32>
    %26 = vector.multi_reduction <add>, %23, %cst_20 [2] : vector<4x8x8xf32> to vector<4x8xf32>
    %27 = vector.shape_cast %26 : vector<4x8xf32> to vector<4x8x1xf32>
    %28 = arith.addf %25, %27 : vector<4x8x1xf32>
    %c0_21 = arith.constant 0 : index
    %c0_22 = arith.constant 0 : index
    %c0_23 = arith.constant 0 : index
    %29 = vector.load %arg8[%c0_21, %c0_22, %c0_23] : memref<4x8x1xf32, #tpu.memory_space<vmem>>, vector<4x8x1xf32>
    tpu.vector_store %arg8[%c0_21, %c0_22, %c0_23], %28 {strides = array<i32>} : memref<4x8x1xf32, #tpu.memory_space<vmem>>, vector<4x8x1xf32>,
    %c0_24 = arith.constant 0 : index
    %c0_25 = arith.constant 0 : index
    %c0_26 = arith.constant 0 : index
    %30 = vector.load %arg9[%c0_24, %c0_25, %c0_26] : memref<4x8x8xf32, #tpu.memory_space<vmem>>, vector<4x8x8xf32>
    %31 = vector.broadcast %20 : vector<4x8x1xf32> to vector<4x8x8xf32>
    %32 = arith.mulf %31, %30 : vector<4x8x8xf32>
    %33 = arith.truncf %23 : vector<4x8x8xf32> to vector<4x8x8xbf16>
    "tpu.trace_start"() <{level = 10 : i32, message = "hqk,hkd->hqd"}> : () -> ()
    %cst_27 = arith.constant dense<0.000000e+00> : vector<4x8x8xf32>
    %34 = tpu.matmul %33, %13, %cst_27 {dimension_numbers = #tpu.dot_dimension_numbers<[2], [1], [1], [2], [0, 0, 0, 1, 1, 2], [0], [0]>} : vector<4x8x8xbf16>, vector<4x8x8xbf16>, vector<4x8x8xf32> -> vector<4x8x8xf32>
    "tpu.trace_stop"() : () -> ()
    %35 = arith.addf %32, %34 : vector<4x8x8xf32>
    %c0_28 = arith.constant 0 : index
    %c0_29 = arith.constant 0 : index
    %c0_30 = arith.constant 0 : index
    %36 = vector.load %arg9[%c0_28, %c0_29, %c0_30] : memref<4x8x8xf32, #tpu.memory_space<vmem>>, vector<4x8x8xf32>
    tpu.vector_store %arg9[%c0_28, %c0_29, %c0_30], %35 {strides = array<i32>} : memref<4x8x8xf32, #tpu.memory_space<vmem>>, vector<4x8x8xf32>,
    %c0_31 = arith.constant 0 : index
    %c0_32 = arith.constant 0 : index
    %c0_33 = arith.constant 0 : index
    %37 = vector.load %arg7[%c0_31, %c0_32, %c0_33] : memref<4x8x1xf32, #tpu.memory_space<vmem>>, vector<4x8x1xf32>
    tpu.vector_store %arg7[%c0_31, %c0_32, %c0_33], %18 {strides = array<i32>} : memref<4x8x1xf32, #tpu.memory_space<vmem>>, vector<4x8x1xf32>,
    %c0_i32_34 = arith.constant 0 : i32
    %38 = arith.cmpi eq, %arg2, %c0_i32_34 : i32
    %39 = arith.extui %38 : i1 to i32
    %c0_i32_35 = arith.constant 0 : i32
    %40 = arith.cmpi ne, %39, %c0_i32_35 : i32
    scf.if %40 {
      %c0_36 = arith.constant 0 : index
      %c0_37 = arith.constant 0 : index
      %c0_38 = arith.constant 0 : index
      %41 = vector.load %arg8[%c0_36, %c0_37, %c0_38] : memref<4x8x1xf32, #tpu.memory_space<vmem>>, vector<4x8x1xf32>
      %42 = tpu.reciprocal %41 {approx = true} : vector<4x8x1xf32> -> vector<4x8x1xf32>
      %c0_39 = arith.constant 0 : index
      %c0_40 = arith.constant 0 : index
      %c0_41 = arith.constant 0 : index
      %43 = vector.load %arg9[%c0_39, %c0_40, %c0_41] : memref<4x8x8xf32, #tpu.memory_space<vmem>>, vector<4x8x8xf32>
      %44 = vector.broadcast %42 : vector<4x8x1xf32> to vector<4x8x8xf32>
      %45 = arith.mulf %43, %44 : vector<4x8x8xf32>
      %c0_42 = arith.constant 0 : index
      %c0_43 = arith.constant 0 : index
      %c0_44 = arith.constant 0 : index
      %c0_45 = arith.constant 0 : index
      %46 = vector.load %arg6[%c0_42, %c0_43, %c0_44, %c0_45] : memref<1x4x8x8xf32, #tpu.memory_space<vmem>>, vector<1x4x8x8xf32>
      %47 = vector.shape_cast %46 : vector<1x4x8x8xf32> to vector<4x8x8xf32>
      %48 = vector.shape_cast %45 : vector<4x8x8xf32> to vector<1x4x8x8xf32>
      tpu.vector_store %arg6[%c0_42, %c0_43, %c0_44, %c0_45], %48 {strides = array<i32>} : memref<1x4x8x8xf32, #tpu.memory_space<vmem>>, vector<1x4x8x8xf32>,
    } else {
    }
    return
  }
  func.func @transform_0(%arg0: i32, %arg1: i32, %arg2: i32) -> (i32, i32, i32, i32) {
    %c0_i32 = arith.constant 0 : i32
    %c0_i32_0 = arith.constant 0 : i32
    %c0_i32_1 = arith.constant 0 : i32
    return %arg0, %c0_i32, %arg1, %c0_i32_0 : i32, i32, i32, i32
  }
  func.func @transform_1(%arg0: i32, %arg1: i32, %arg2: i32) -> (i32, i32, i32, i32) {
    %c0_i32 = arith.constant 0 : i32
    %c0_i32_0 = arith.constant 0 : i32
    %c0_i32_1 = arith.constant 0 : i32
    return %arg0, %c0_i32, %arg2, %c0_i32_0 : i32, i32, i32, i32
  }
  func.func @transform_2(%arg0: i32, %arg1: i32, %arg2: i32) -> (i32, i32, i32, i32) {
    %c0_i32 = arith.constant 0 : i32
    %c0_i32_0 = arith.constant 0 : i32
    %c0_i32_1 = arith.constant 0 : i32
    return %arg0, %c0_i32, %arg2, %c0_i32_0 : i32, i32, i32, i32
  }
  func.func @transform_3(%arg0: i32, %arg1: i32, %arg2: i32) -> (i32, i32, i32, i32) {
    %c0_i32 = arith.constant 0 : i32
    %c0_i32_0 = arith.constant 0 : i32
    %c0_i32_1 = arith.constant 0 : i32
    return %arg0, %c0_i32, %arg1, %c0_i32_0 : i32, i32, i32, i32
  }
}

</mosaic_0001>

<llo_original>
// kernel: _lambda_.3
$region0: #{_lambda_.3}
  #allocation0 [shape = 'u32[]', space=smem, size = 0x4, offset = 0x4, fixed_abs, tag = 'smem constant byte address 0x4 - core index']
  #allocation1 [shape = 'u32[72,128]{1,0:T(1,128)}', space=vmem, size = 0x9000, scoped, tag = 'internal scratch']
  %s0 = inlined_call_operand.hbm [shape: f32[2,8,32], index: 0, kind: input, shape index: {}]
  %s1 = inlined_call_operand.hbm [shape: bf16[32,96], index: 1, kind: input, shape index: {}]
  %s2 = inlined_call_operand.vmem [shape: f32[1,96], index: 2, kind: input, shape index: {}]
  %s3 = inlined_call_operand.vmem [shape: f32[2,8,96], index: 3, kind: output, shape index: {}]
  %s4 = sld [smem:[#allocation0]]
  $region53: #{_lambda_.3} parent=0
    _
  %s6 = ssub.s32 1, %s4
  %s7 = scalar_select 0, %s6, %s4
  $region1: #{_lambda_.3} parent=0
    #allocation2 [shape = 'u8[8192]{0}', space=vmem, size = 0x2000, scoped, tag = 'input window, operand 0']
    #allocation3 [shape = 's32[2]{0}', space=sflag, size = 0x8, scoped, tag = 'scoped memory for _lambda_.3']
    #allocation4 [shape = 'u8[8192]{0}', space=vmem, size = 0x2000, scoped, tag = 'input window, operand 1, single buffered']
    #allocation5 [shape = 's32[1]{0}', space=sflag, size = 0x4, scoped, tag = 'scoped memory for _lambda_.3']
    %8 = vsyncpa [#allocation3], 0
    %s9 = scalar_lea.sflag [#allocation3], 1
    %10 = vsyncpa %s9, 0
    %11 = vsyncpa [#allocation5], 0
    loop: start=0, step=1, limit=4
    $region2: #{_lambda_.3} parent=1 // loop_pre_header
      _
    $region3: #{_lambda_.3} parent=1 // loop_header
      %s13 = sphi 0, %s17
      %p14 = scmp.ge.s32.totalorder %s13, 4
      %s20 = sphi 0, %s32
      %s21 = sphi 0, %s28
      %s22 = sphi 0, %s20
      %s23 = sphi 0, %s21
      %s24 = sphi 0, %s22
      %s25 = sphi 0, %s23
      %s37 = sphi 0, %s39
      %s40 = sphi 0, %s37
      %s41 = sphi 0, %s40
      %s57 = sphi 0, %s41
      %s61 = sphi 0, %s61
      %s63 = sphi 0, %s61
      %s64 = sphi 0, %s63
      %s78 = sphi 0, %s64
      %s82 = sphi 0, %s82
      %s84 = sphi 0, %s82
      %s85 = sphi 0, %s84
      %s99 = sphi 0, %s85
      %s107 = sphi 0, %s109
      %s110 = sphi 0, %s107
      %s111 = sphi 0, %s110
      %s127 = sphi 0, %s111
    $region4: #{_lambda_.3} parent=1 // loop_header_branch
      %16 = sbr.rel (%p14) target = $region8
    $region5: #{_lambda_.3} parent=1 // loop_body
      %s18 = ssub.s32 %s13, 1
      %s19 = ssub.s32 %s13, 2
      %s26 = sadd.s32 1, %s21
      %p27 = scmp.ge.s32.totalorder %s26, 1
      %s28 = scalar_select %p27, 0, %s26
      %s29 = sadd.s32 1, %s20
      %s30 = scalar_select %p27, %s29, %s20
      %p31 = scmp.ge.s32.totalorder %s30, 2
      %s32 = scalar_select %p31, 0, %s30
      %s33 = ssub.s32 %s20, %s32
      %s34 = ssub.s32 %s21, %s28
      %s35 = sor.u32 %s33, %s34
      %p36 = scmp.eq.s32.totalorder %s35, 0
      %s38 = sadd.s32 %s37, 1
      %s39 = scalar_select %p36, %s37, %s38
      %p42 = pneg %p36
      %p43 = scmp.eq.s32.totalorder %s13, 1
      %p44 = por %p42, %p43
      %p45 = scmp.ne.s32.totalorder %s37, %s40
      %p46 = scmp.eq.s32.totalorder %s13, 0
      %p47 = por %p45, %p46
      %p48 = scmp.ne.s32.totalorder %s37, %s40
      %p49 = scmp.eq.s32.totalorder %s18, 1
      %p50 = por %p48, %p49
      %p51 = scmp.ne.s32.totalorder %s40, %s41
      %p52 = scmp.eq.s32.totalorder %s18, 0
      %p53 = por %p51, %p52
      %p54 = scmp.ne.s32.totalorder %s40, %s41
      %p55 = scmp.eq.s32.totalorder %s19, 1
      %p56 = por %p54, %p55
      %p58 = scmp.ne.s32.totalorder %s41, %s57
      %p59 = scmp.eq.s32.totalorder %s19, 0
      %p60 = por %p58, %p59
      %s62 = sadd.s32 %s61, 1
      %p65 = scmp.eq.s32.totalorder %s13, 1
      %p66 = scmp.ne.s32.totalorder %s61, %s63
      %p67 = scmp.eq.s32.totalorder %s13, 0
      %p68 = por %p66, %p67
      %p69 = scmp.ne.s32.totalorder %s61, %s63
      %p70 = scmp.eq.s32.totalorder %s18, 1
      %p71 = por %p69, %p70
      %p72 = scmp.ne.s32.totalorder %s63, %s64
      %p73 = scmp.eq.s32.totalorder %s18, 0
      %p74 = por %p72, %p73
      %p75 = scmp.ne.s32.totalorder %s63, %s64
      %p76 = scmp.eq.s32.totalorder %s19, 1
      %p77 = por %p75, %p76
      %p79 = scmp.ne.s32.totalorder %s64, %s78
      %p80 = scmp.eq.s32.totalorder %s19, 0
      %p81 = por %p79, %p80
      %s83 = sadd.s32 %s82, 1
      %p86 = scmp.eq.s32.totalorder %s13, 1
      %p87 = scmp.ne.s32.totalorder %s82, %s84
      %p88 = scmp.eq.s32.totalorder %s13, 0
      %p89 = por %p87, %p88
      %p90 = scmp.ne.s32.totalorder %s82, %s84
      %p91 = scmp.eq.s32.totalorder %s18, 1
      %p92 = por %p90, %p91
      %p93 = scmp.ne.s32.totalorder %s84, %s85
      %p94 = scmp.eq.s32.totalorder %s18, 0
      %p95 = por %p93, %p94
      %p96 = scmp.ne.s32.totalorder %s84, %s85
      %p97 = scmp.eq.s32.totalorder %s19, 1
      %p98 = por %p96, %p97
      %p100 = scmp.ne.s32.totalorder %s85, %s99
      %p101 = scmp.eq.s32.totalorder %s19, 0
      %p102 = por %p100, %p101
      %s103 = ssub.s32 %s20, %s32
      %s104 = ssub.s32 %s21, %s28
      %s105 = sor.u32 %s103, %s104
      %p106 = scmp.eq.s32.totalorder %s105, 0
      %s108 = sadd.s32 %s107, 1
      %s109 = scalar_select %p106, %s107, %s108
      %p112 = pneg %p106
      %p113 = scmp.eq.s32.totalorder %s13, 1
      %p114 = por %p112, %p113
      %p115 = scmp.ne.s32.totalorder %s107, %s110
      %p116 = scmp.eq.s32.totalorder %s13, 0
      %p117 = por %p115, %p116
      %p118 = scmp.ne.s32.totalorder %s107, %s110
      %p119 = scmp.eq.s32.totalorder %s18, 1
      %p120 = por %p118, %p119
      %p121 = scmp.ne.s32.totalorder %s110, %s111
      %p122 = scmp.eq.s32.totalorder %s18, 0
      %p123 = por %p121, %p122
      %p124 = scmp.ne.s32.totalorder %s110, %s111
      %p125 = scmp.eq.s32.totalorder %s19, 1
      %p126 = por %p124, %p125
      %p128 = scmp.ne.s32.totalorder %s111, %s127
      %p129 = scmp.eq.s32.totalorder %s19, 0
      %p130 = por %p128, %p129
      %p131 = scmp.le.s32.totalorder 1, %s13
      %p132 = scmp.lt.s32.totalorder %s13, 3
      %p133 = pnand %p131, %p132
      %p134 = pneg %p133
      // Predicated region
      $region9: #{_lambda_.3} parent=5 // pred_check
        _
      $region10: #{_lambda_.3} parent=5 // pred_check_branch
        %136 = sbr.rel (%p133) target = $region12
      $region11: #{_lambda_.3} parent=5 // pred_region
        %s137 = ssub.s32 %s13, 1
        // Predicated region
        $region13: #{_lambda_.3} parent=11 // pred_check
          %p138 = pneg %p74
        $region14: #{_lambda_.3} parent=11 // pred_check_branch
          %140 = sbr.rel (%p138) target = $region16
        $region15: #{_lambda_.3} parent=11 // pred_region
          %142 = vsyncadd [#allocation5], 0
          %s143 = sshll.u32 %s1, 4
          %s144 = int_to_ptr.hbm [resolvable:$true] %s143
          %s145 = sshll.u32 [#allocation4], 4
          %s146 = int_to_ptr.vmem [resolvable:$true] %s145
          %151 = dma.hbm_to_vmem [thread:$0]  %s144, 256, %s146, [#allocation5], 64, 64, 4
        $region16: #{_lambda_.3} parent=11 // pred_fallthru
          _
        // Predicated region
        $region17: #{_lambda_.3} parent=11 // pred_check
          %p152 = pneg %p95
        $region18: #{_lambda_.3} parent=11 // pred_check_branch
          %154 = sbr.rel (%p152) target = $region20
        $region19: #{_lambda_.3} parent=11 // pred_region
          _
        $region20: #{_lambda_.3} parent=11 // pred_fallthru
          _
      $region12: #{_lambda_.3} parent=5 // pred_fallthru
        _
      %p155 = scmp.lt.s32.totalorder %s13, 2
      // Predicated region
      $region21: #{_lambda_.3} parent=5 // pred_check
        %p156 = pneg %p155
      $region22: #{_lambda_.3} parent=5 // pred_check_branch
        %158 = sbr.rel (%p156) target = $region24
      $region23: #{_lambda_.3} parent=5 // pred_region
        // Predicated region
        $region25: #{_lambda_.3} parent=23 // pred_check
          %p159 = pneg %p47
        $region26: #{_lambda_.3} parent=23 // pred_check_branch
          %161 = sbr.rel (%p159) target = $region28
        $region27: #{_lambda_.3} parent=23 // pred_region
          %s162 = sand.u32 %s37, 1
          %s163 = scalar_lea.sflag [#allocation3], %s162
          %s164 = sand.u32 %s37, 1
          %s165 = smul.addr %s164, 8
          %s166 = scalar_lea.vmem [#allocation2], %s165
          %168 = vsyncadd %s163, 0
          %s169 = sadd.s32 %s21, %s20
          %s170 = smul.addr %s169, 8
          %s171 = scalar_lea.hbm %s0, %s170
          %s173 = sshll.u32 %s171, 4
          %s174 = int_to_ptr.hbm [resolvable:$true] %s173
          %s175 = sshll.u32 %s166, 4
          %s176 = int_to_ptr.vmem [resolvable:$true] %s175
          %178 = dma.hbm_to_vmem [thread:$0]  %s174, 128, %s176, %s163
        $region28: #{_lambda_.3} parent=23 // pred_fallthru
          _
      $region24: #{_lambda_.3} parent=5 // pred_fallthru
        _
      %p179 = scmp.le.s32.totalorder 1, %s13
      %p180 = scmp.lt.s32.totalorder %s13, 3
      %p181 = pnand %p179, %p180
      %p182 = pneg %p181
      // Predicated region
      $region29: #{_lambda_.3} parent=5 // pred_check
        _
      $region30: #{_lambda_.3} parent=5 // pred_check_branch
        %184 = sbr.rel (%p181) target = $region32
      $region31: #{_lambda_.3} parent=5 // pred_region
        %s185 = ssub.s32 %s13, 1
        %s186 = sand.u32 %s40, 1
        %s187 = scalar_lea.sflag [#allocation3], %s186
        %s188 = sand.u32 %s40, 1
        %s189 = smul.addr %s188, 8
        %s190 = scalar_lea.vmem [#allocation2], %s189
        // Predicated region
        $region33: #{_lambda_.3} parent=31 // pred_check
          %p191 = pneg %p53
        $region34: #{_lambda_.3} parent=31 // pred_check_branch
          %193 = sbr.rel (%p191) target = $region36
        $region35: #{_lambda_.3} parent=31 // pred_region
          %195 = dma.done %s187, 128
        $region36: #{_lambda_.3} parent=31 // pred_fallthru
          _
        // Predicated region
        $region37: #{_lambda_.3} parent=31 // pred_check
          %p196 = pneg %p74
        $region38: #{_lambda_.3} parent=31 // pred_check_branch
          %198 = sbr.rel (%p196) target = $region40
        $region39: #{_lambda_.3} parent=31 // pred_region
          %200 = dma.done [#allocation5], 256
        $region40: #{_lambda_.3} parent=31 // pred_fallthru
          _
        %s201 = sand.u32 %s40, 1
        %s202 = scalar_lea.sflag [#allocation3], %s201
        %s203 = sand.u32 %s40, 1
        %s204 = smul.addr %s203, 8
        %s205 = scalar_lea.vmem [#allocation2], %s204
        %p206 = pneg %p53
        %p207 = pneg %p50
        %p208 = pneg %p74
        %p209 = pneg %p71
        %p210 = pneg %p95
        %p211 = pneg %p92
        %p212 = pneg %p123
        %p213 = pneg %p120
        %p214 = scmp.lt.s32.totalorder %s22, 1
        %s215 = scalar_select %p214, %s22, 1
        %p216 = scmp.lt.s32.totalorder %s23, 0
        %s217 = scalar_select %p216, %s23, 0
        %s218 = sadd.s32 %s217, %s215
        %s219 = smul.addr %s218, 8
        %s220 = scalar_lea.vmem %s3, %s219
        %p221 = scmp.lt.s32.totalorder %s22, 1
        %s222 = scalar_select %p221, %s22, 1
        %p223 = scmp.lt.s32.totalorder %s23, 0
        %s224 = scalar_select %p223, %s23, 0
        %s225 = sadd.s32 %s224, %s222
        %s226 = smul.addr %s225, 8
        %s227 = scalar_lea.vmem %s3, %s226
        %v229 = vld [vmem:[%s190] sm:$0xff]
        %v230 = vpack.c.bf16 %v229, %v229
        %v231 = vld [vmem:[#allocation4] sm:$0xf]
        %v232 = vld [vmem:[#allocation4 + $0x4] sm:$0xf]
        %v233 = vld [vmem:[#allocation4 + $0x8] sm:$0xf]
        %v234 = vld [vmem:[#allocation4 + $0xc] sm:$0xf]
        %v235 = vld [vmem:[%s2] sm:$0x1]
        %v237 = vperm.slane %v235, 0
        %v243 = vunpack.c.l.b16 %v231
        %v244 = vunpack.c.l.b16 %v232
        %v245 = vunpack.c.l.b16 %v233
        %v246 = vunpack.c.l.b16 %v234
        %v247 = vpack.c.b16 %v244, %v243
        %v248 = vpack.c.b16 %v246, %v245
        %vm251 = vcmask 261120
        %v253 = vsel %vm251, %v230, 0
        %255 = vmatpush.bf16.msra.mxu0 0
        %256 = vmatpush.bf16.msra.mxu0 0
        %257 = vmatpush.bf16.msra.mxu0 0
        %258 = vmatpush.bf16.msra.mxu0 0
        %259 = vmatpush.bf16.msra.mxu0 0
        %260 = vmatpush.bf16.msra.mxu0 0
        %261 = vmatpush.bf16.msra.mxu0 %v248
        %262 = vmatpush.bf16.msra.mxu0 %v247
        %263 = vmatmul.bf16.gmra.mxu0 %v253
        %v264 = vpop.f32.mrf.mxu0
        %v265 = vadd.f32 %v237, %v264
        %v266 = vpop.f32.mrf.mxu0
        %267 = vdwg.mxu0
        %vm268 = vcmask 785408
        %269 = vst.msk [vmem:[%s227] sm:$0xff] %vm268, %v265
        %p270 = scmp.lt.s32.totalorder %s22, 1
        %s271 = scalar_select %p270, %s22, 1
        %p272 = scmp.lt.s32.totalorder %s23, 0
        %s273 = scalar_select %p272, %s23, 0
        %s274 = sadd.s32 %s273, %s271
        %s275 = smul.addr %s274, 8
        %s276 = scalar_lea.vmem %s3, %s275
        // Predicated region
        $region41: #{_lambda_.3} parent=31 // pred_check
          %p277 = pneg %p120
        $region42: #{_lambda_.3} parent=31 // pred_check_branch
          %279 = sbr.rel (%p277) target = $region44
        $region43: #{_lambda_.3} parent=31 // pred_region
          _
        $region44: #{_lambda_.3} parent=31 // pred_fallthru
          _
      $region32: #{_lambda_.3} parent=5 // pred_fallthru
        _
      %p280 = scmp.le.s32.totalorder 2, %s13
      // Predicated region
      $region45: #{_lambda_.3} parent=5 // pred_check
        %p281 = pneg %p280
      $region46: #{_lambda_.3} parent=5 // pred_check_branch
        %283 = sbr.rel (%p281) target = $region48
      $region47: #{_lambda_.3} parent=5 // pred_region
        %s284 = ssub.s32 %s13, 2
        // Predicated region
        $region49: #{_lambda_.3} parent=47 // pred_check
          %p285 = pneg %p126
        $region50: #{_lambda_.3} parent=47 // pred_check_branch
          %287 = sbr.rel (%p285) target = $region52
        $region51: #{_lambda_.3} parent=47 // pred_region
          %p288 = scmp.lt.s32.totalorder %s24, 1
          %s289 = scalar_select %p288, %s24, 1
          %p290 = scmp.lt.s32.totalorder %s25, 0
          %s291 = scalar_select %p290, %s25, 0
          %s292 = sadd.s32 %s291, %s289
          %s293 = smul.addr %s292, 8
          %s294 = scalar_lea.vmem %s3, %s293
        $region52: #{_lambda_.3} parent=47 // pred_fallthru
          _
      $region48: #{_lambda_.3} parent=5 // pred_fallthru
        _
    $region6: #{_lambda_.3} parent=1 // loop_footer
      %s17 = sadd.s32 1, %s13
    $region7: #{_lambda_.3} parent=1 // loop_footer_branch
      %12 = sbr.rel target = $region3
    $region8: #{_lambda_.3} parent=1 // loop_exit
      _
    %295 = vsyncpa [#allocation3], 1
    %s296 = scalar_lea.sflag [#allocation3], 1
    %297 = vsyncpa %s296, 1
    %298 = vsyncpa [#allocation5], 1

// kernel: _lambda_.5
$region0: #{_lambda_.5}
  #allocation0 [shape = 'u32[]', space=smem, size = 0x4, offset = 0x4, fixed_abs, tag = 'smem constant byte address 0x4 - core index']
  #allocation1 [shape = 'u32[72,128]{1,0:T(1,128)}', space=vmem, size = 0x9000, scoped, tag = 'internal scratch']
  %s0 = inlined_call_operand.vmem [shape: f32[2,8,32], index: 0, kind: input, shape index: {}]
  %s1 = inlined_call_operand.vmem [shape: bf16[32,32], index: 1, kind: input, shape index: {}]
  %s2 = inlined_call_operand.vmem [shape: f32[1,32], index: 2, kind: input, shape index: {}]
  %s3 = inlined_call_operand.hbm [shape: f32[2,8,32], index: 3, kind: output, shape index: {}]
  %s4 = sld [smem:[#allocation0]]
  $region45: #{_lambda_.5} parent=0
    _
  %s6 = ssub.s32 1, %s4
  %s7 = scalar_select 0, %s6, %s4
  $region1: #{_lambda_.5} parent=0
    #allocation2 [shape = 'u8[8192]{0}', space=vmem, size = 0x2000, scoped, tag = 'output window, operand 0']
    #allocation3 [shape = 's32[2]{0}', space=sflag, size = 0x8, scoped, tag = 'scoped memory for _lambda_.5']
    %8 = vsyncpa [#allocation3], 0
    %s9 = scalar_lea.sflag [#allocation3], 1
    %10 = vsyncpa %s9, 0
    loop: start=0, step=1, limit=4
    $region2: #{_lambda_.5} parent=1 // loop_pre_header
      _
    $region3: #{_lambda_.5} parent=1 // loop_header
      %s12 = sphi 0, %s16
      %p13 = scmp.ge.s32.totalorder %s12, 4
      %s19 = sphi 0, %s31
      %s20 = sphi 0, %s27
      %s21 = sphi 0, %s19
      %s22 = sphi 0, %s20
      %s23 = sphi 0, %s21
      %s24 = sphi 0, %s22
      %s36 = sphi 0, %s38
      %s39 = sphi 0, %s36
      %s40 = sphi 0, %s39
      %s56 = sphi 0, %s40
      %s60 = sphi 0, %s60
      %s62 = sphi 0, %s60
      %s63 = sphi 0, %s62
      %s77 = sphi 0, %s63
      %s81 = sphi 0, %s81
      %s83 = sphi 0, %s81
      %s84 = sphi 0, %s83
      %s98 = sphi 0, %s84
      %s106 = sphi 0, %s108
      %s109 = sphi 0, %s106
      %s110 = sphi 0, %s109
      %s126 = sphi 0, %s110
    $region4: #{_lambda_.5} parent=1 // loop_header_branch
      %15 = sbr.rel (%p13) target = $region8
    $region5: #{_lambda_.5} parent=1 // loop_body
      %s17 = ssub.s32 %s12, 1
      %s18 = ssub.s32 %s12, 2
      %s25 = sadd.s32 1, %s20
      %p26 = scmp.ge.s32.totalorder %s25, 1
      %s27 = scalar_select %p26, 0, %s25
      %s28 = sadd.s32 1, %s19
      %s29 = scalar_select %p26, %s28, %s19
      %p30 = scmp.ge.s32.totalorder %s29, 2
      %s31 = scalar_select %p30, 0, %s29
      %s32 = ssub.s32 %s19, %s31
      %s33 = ssub.s32 %s20, %s27
      %s34 = sor.u32 %s32, %s33
      %p35 = scmp.eq.s32.totalorder %s34, 0
      %s37 = sadd.s32 %s36, 1
      %s38 = scalar_select %p35, %s36, %s37
      %p41 = pneg %p35
      %p42 = scmp.eq.s32.totalorder %s12, 1
      %p43 = por %p41, %p42
      %p44 = scmp.ne.s32.totalorder %s36, %s39
      %p45 = scmp.eq.s32.totalorder %s12, 0
      %p46 = por %p44, %p45
      %p47 = scmp.ne.s32.totalorder %s36, %s39
      %p48 = scmp.eq.s32.totalorder %s17, 1
      %p49 = por %p47, %p48
      %p50 = scmp.ne.s32.totalorder %s39, %s40
      %p51 = scmp.eq.s32.totalorder %s17, 0
      %p52 = por %p50, %p51
      %p53 = scmp.ne.s32.totalorder %s39, %s40
      %p54 = scmp.eq.s32.totalorder %s18, 1
      %p55 = por %p53, %p54
      %p57 = scmp.ne.s32.totalorder %s40, %s56
      %p58 = scmp.eq.s32.totalorder %s18, 0
      %p59 = por %p57, %p58
      %s61 = sadd.s32 %s60, 1
      %p64 = scmp.eq.s32.totalorder %s12, 1
      %p65 = scmp.ne.s32.totalorder %s60, %s62
      %p66 = scmp.eq.s32.totalorder %s12, 0
      %p67 = por %p65, %p66
      %p68 = scmp.ne.s32.totalorder %s60, %s62
      %p69 = scmp.eq.s32.totalorder %s17, 1
      %p70 = por %p68, %p69
      %p71 = scmp.ne.s32.totalorder %s62, %s63
      %p72 = scmp.eq.s32.totalorder %s17, 0
      %p73 = por %p71, %p72
      %p74 = scmp.ne.s32.totalorder %s62, %s63
      %p75 = scmp.eq.s32.totalorder %s18, 1
      %p76 = por %p74, %p75
      %p78 = scmp.ne.s32.totalorder %s63, %s77
      %p79 = scmp.eq.s32.totalorder %s18, 0
      %p80 = por %p78, %p79
      %s82 = sadd.s32 %s81, 1
      %p85 = scmp.eq.s32.totalorder %s12, 1
      %p86 = scmp.ne.s32.totalorder %s81, %s83
      %p87 = scmp.eq.s32.totalorder %s12, 0
      %p88 = por %p86, %p87
      %p89 = scmp.ne.s32.totalorder %s81, %s83
      %p90 = scmp.eq.s32.totalorder %s17, 1
      %p91 = por %p89, %p90
      %p92 = scmp.ne.s32.totalorder %s83, %s84
      %p93 = scmp.eq.s32.totalorder %s17, 0
      %p94 = por %p92, %p93
      %p95 = scmp.ne.s32.totalorder %s83, %s84
      %p96 = scmp.eq.s32.totalorder %s18, 1
      %p97 = por %p95, %p96
      %p99 = scmp.ne.s32.totalorder %s84, %s98
      %p100 = scmp.eq.s32.totalorder %s18, 0
      %p101 = por %p99, %p100
      %s102 = ssub.s32 %s19, %s31
      %s103 = ssub.s32 %s20, %s27
      %s104 = sor.u32 %s102, %s103
      %p105 = scmp.eq.s32.totalorder %s104, 0
      %s107 = sadd.s32 %s106, 1
      %s108 = scalar_select %p105, %s106, %s107
      %p111 = pneg %p105
      %p112 = scmp.eq.s32.totalorder %s12, 1
      %p113 = por %p111, %p112
      %p114 = scmp.ne.s32.totalorder %s106, %s109
      %p115 = scmp.eq.s32.totalorder %s12, 0
      %p116 = por %p114, %p115
      %p117 = scmp.ne.s32.totalorder %s106, %s109
      %p118 = scmp.eq.s32.totalorder %s17, 1
      %p119 = por %p117, %p118
      %p120 = scmp.ne.s32.totalorder %s109, %s110
      %p121 = scmp.eq.s32.totalorder %s17, 0
      %p122 = por %p120, %p121
      %p123 = scmp.ne.s32.totalorder %s109, %s110
      %p124 = scmp.eq.s32.totalorder %s18, 1
      %p125 = por %p123, %p124
      %p127 = scmp.ne.s32.totalorder %s110, %s126
      %p128 = scmp.eq.s32.totalorder %s18, 0
      %p129 = por %p127, %p128
      %p130 = scmp.le.s32.totalorder 1, %s12
      %p131 = scmp.lt.s32.totalorder %s12, 3
      %p132 = pnand %p130, %p131
      %p133 = pneg %p132
      // Predicated region
      $region9: #{_lambda_.5} parent=5 // pred_check
        _
      $region10: #{_lambda_.5} parent=5 // pred_check_branch
        %135 = sbr.rel (%p132) target = $region12
      $region11: #{_lambda_.5} parent=5 // pred_region
        %s136 = ssub.s32 %s12, 1
        // Predicated region
        $region13: #{_lambda_.5} parent=11 // pred_check
          %p137 = pneg %p73
        $region14: #{_lambda_.5} parent=11 // pred_check_branch
          %139 = sbr.rel (%p137) target = $region16
        $region15: #{_lambda_.5} parent=11 // pred_region
          _
        $region16: #{_lambda_.5} parent=11 // pred_fallthru
          _
        // Predicated region
        $region17: #{_lambda_.5} parent=11 // pred_check
          %p140 = pneg %p94
        $region18: #{_lambda_.5} parent=11 // pred_check_branch
          %142 = sbr.rel (%p140) target = $region20
        $region19: #{_lambda_.5} parent=11 // pred_region
          _
        $region20: #{_lambda_.5} parent=11 // pred_fallthru
          _
      $region12: #{_lambda_.5} parent=5 // pred_fallthru
        _
      %p143 = scmp.lt.s32.totalorder %s12, 2
      // Predicated region
      $region21: #{_lambda_.5} parent=5 // pred_check
        %p144 = pneg %p143
      $region22: #{_lambda_.5} parent=5 // pred_check_branch
        %146 = sbr.rel (%p144) target = $region24
      $region23: #{_lambda_.5} parent=5 // pred_region
        // Predicated region
        $region25: #{_lambda_.5} parent=23 // pred_check
          %p147 = pneg %p46
        $region26: #{_lambda_.5} parent=23 // pred_check_branch
          %149 = sbr.rel (%p147) target = $region28
        $region27: #{_lambda_.5} parent=23 // pred_region
          %p150 = scmp.lt.s32.totalorder %s19, 1
          %s151 = scalar_select %p150, %s19, 1
          %p152 = scmp.lt.s32.totalorder %s20, 0
          %s153 = scalar_select %p152, %s20, 0
          %s154 = sadd.s32 %s153, %s151
          %s155 = smul.addr %s154, 8
          %s156 = scalar_lea.vmem %s0, %s155
        $region28: #{_lambda_.5} parent=23 // pred_fallthru
          _
      $region24: #{_lambda_.5} parent=5 // pred_fallthru
        _
      %p157 = scmp.le.s32.totalorder 1, %s12
      %p158 = scmp.lt.s32.totalorder %s12, 3
      %p159 = pnand %p157, %p158
      %p160 = pneg %p159
      // Predicated region
      $region29: #{_lambda_.5} parent=5 // pred_check
        _
      $region30: #{_lambda_.5} parent=5 // pred_check_branch
        %162 = sbr.rel (%p159) target = $region32
      $region31: #{_lambda_.5} parent=5 // pred_region
        %s163 = ssub.s32 %s12, 1
        %p164 = scmp.lt.s32.totalorder %s21, 1
        %s165 = scalar_select %p164, %s21, 1
        %p166 = scmp.lt.s32.totalorder %s22, 0
        %s167 = scalar_select %p166, %s22, 0
        %s168 = sadd.s32 %s167, %s165
        %s169 = smul.addr %s168, 8
        %s170 = scalar_lea.vmem %s0, %s169
        %p171 = pneg %p52
        %p172 = pneg %p49
        %p173 = pneg %p73
        %p174 = pneg %p70
        %p175 = pneg %p94
        %p176 = pneg %p91
        %p177 = pneg %p122
        %p178 = pneg %p119
        %s179 = sand.u32 %s109, 1
        %s180 = scalar_lea.sflag [#allocation3], %s179
        %s181 = sand.u32 %s109, 1
        %s182 = smul.addr %s181, 8
        %s183 = scalar_lea.vmem [#allocation2], %s182
        %p184 = scmp.lt.s32.totalorder %s21, 1
        %s185 = scalar_select %p184, %s21, 1
        %p186 = scmp.lt.s32.totalorder %s22, 0
        %s187 = scalar_select %p186, %s22, 0
        %s188 = sadd.s32 %s187, %s185
        %s189 = smul.addr %s188, 8
        %s190 = scalar_lea.vmem %s0, %s189
        %v192 = vld [vmem:[%s190] sm:$0xff]
        %v193 = vpack.c.bf16 %v192, %v192
        %v194 = vld [vmem:[%s1] sm:$0xf]
        %v195 = vld [vmem:[%s1 + $0x4] sm:$0xf]
        %v196 = vld [vmem:[%s1 + $0x8] sm:$0xf]
        %v197 = vld [vmem:[%s1 + $0xc] sm:$0xf]
        %v198 = vld [vmem:[%s2] sm:$0x1]
        %v200 = vperm.slane %v198, 0
        %v206 = vunpack.c.l.b16 %v194
        %v207 = vunpack.c.l.b16 %v195
        %v208 = vunpack.c.l.b16 %v196
        %v209 = vunpack.c.l.b16 %v197
        %v210 = vpack.c.b16 %v207, %v206
        %v211 = vpack.c.b16 %v209, %v208
        %vm214 = vcmask 261120
        %v216 = vsel %vm214, %v193, 0
        %218 = vmatpush.bf16.msra.mxu0 0
        %219 = vmatpush.bf16.msra.mxu0 0
        %220 = vmatpush.bf16.msra.mxu0 0
        %221 = vmatpush.bf16.msra.mxu0 0
        %222 = vmatpush.bf16.msra.mxu0 0
        %223 = vmatpush.bf16.msra.mxu0 0
        %224 = vmatpush.bf16.msra.mxu0 %v211
        %225 = vmatpush.bf16.msra.mxu0 %v210
        %226 = vmatmul.bf16.gmra.mxu0 %v216
        %v227 = vpop.f32.mrf.mxu0
        %v228 = vadd.f32 %v200, %v227
        %v229 = vpop.f32.mrf.mxu0
        %230 = vdwg.mxu0
        %231 = vst.msk [vmem:[%s183] sm:$0xff] %vm214, %v228
        %s232 = sand.u32 %s109, 1
        %s233 = scalar_lea.sflag [#allocation3], %s232
        %s234 = sand.u32 %s109, 1
        %s235 = smul.addr %s234, 8
        %s236 = scalar_lea.vmem [#allocation2], %s235
        // Predicated region
        $region33: #{_lambda_.5} parent=31 // pred_check
          %p237 = pneg %p119
        $region34: #{_lambda_.5} parent=31 // pred_check_branch
          %239 = sbr.rel (%p237) target = $region36
        $region35: #{_lambda_.5} parent=31 // pred_region
          %241 = vsyncadd %s233, 0
          %s242 = sadd.s32 %s22, %s21
          %s243 = smul.addr %s242, 8
          %s244 = scalar_lea.hbm %s3, %s243
          %s246 = sshll.u32 %s236, 4
          %s247 = int_to_ptr.vmem [resolvable:$true] %s246
          %s248 = sshll.u32 %s244, 4
          %s249 = int_to_ptr.hbm [resolvable:$true] %s248
          %251 = dma.vmem_to_hbm [thread:$0]  %s247, 128, %s249, %s233
        $region36: #{_lambda_.5} parent=31 // pred_fallthru
          _
      $region32: #{_lambda_.5} parent=5 // pred_fallthru
        _
      %p252 = scmp.le.s32.totalorder 2, %s12
      // Predicated region
      $region37: #{_lambda_.5} parent=5 // pred_check
        %p253 = pneg %p252
      $region38: #{_lambda_.5} parent=5 // pred_check_branch
        %255 = sbr.rel (%p253) target = $region40
      $region39: #{_lambda_.5} parent=5 // pred_region
        %s256 = ssub.s32 %s12, 2
        // Predicated region
        $region41: #{_lambda_.5} parent=39 // pred_check
          %p257 = pneg %p125
        $region42: #{_lambda_.5} parent=39 // pred_check_branch
          %259 = sbr.rel (%p257) target = $region44
        $region43: #{_lambda_.5} parent=39 // pred_region
          %s260 = sand.u32 %s110, 1
          %s261 = scalar_lea.sflag [#allocation3], %s260
          %s262 = sand.u32 %s110, 1
          %s263 = smul.addr %s262, 8
          %s264 = scalar_lea.vmem [#allocation2], %s263
          %266 = dma.done %s261, 128
        $region44: #{_lambda_.5} parent=39 // pred_fallthru
          _
      $region40: #{_lambda_.5} parent=5 // pred_fallthru
        _
    $region6: #{_lambda_.5} parent=1 // loop_footer
      %s16 = sadd.s32 1, %s12
    $region7: #{_lambda_.5} parent=1 // loop_footer_branch
      %11 = sbr.rel target = $region3
    $region8: #{_lambda_.5} parent=1 // loop_exit
      _
    %267 = vsyncpa [#allocation3], 1
    %s268 = scalar_lea.sflag [#allocation3], 1
    %269 = vsyncpa %s268, 1

// kernel: _lambda_.4
$region0: #{_lambda_.4}
  #allocation0 [shape = 'u32[]', space=smem, size = 0x4, offset = 0x4, fixed_abs, tag = 'smem constant byte address 0x4 - core index']
  #allocation1 [shape = 'u32[72,128]{1,0:T(1,128)}', space=vmem, size = 0x9000, scoped, tag = 'internal scratch']
  #allocation2 [shape = 'f32[4,8,1]{2,1,0:T(8,128)}', space=vmem, size = 0x4000, scoped, tag = 'scratch operand']
  #allocation3 [shape = 'f32[4,8,1]{2,1,0:T(8,128)}', space=vmem, size = 0x4000, scoped, tag = 'scratch operand']
  #allocation4 [shape = 'f32[4,8,8]{2,1,0:T(8,128)}', space=vmem, size = 0x4000, scoped, tag = 'scratch operand']
  %s0 = inlined_call_operand.vmem [shape: f32[2,4,8,8], index: 0, kind: input, shape index: {}]
  %s1 = inlined_call_operand.vmem [shape: f32[2,4,8,8], index: 1, kind: input, shape index: {}]
  %s2 = inlined_call_operand.vmem [shape: f32[2,4,8,8], index: 2, kind: input, shape index: {}]
  %s3 = inlined_call_operand.vmem [shape: f32[2,4,8,8], index: 3, kind: output, shape index: {}]
  %s4 = sld [smem:[#allocation0]]
  $region53: #{_lambda_.4} parent=0
    _
  %s6 = ssub.s32 1, %s4
  %s7 = scalar_select 0, %s6, %s4
  loop: start=0, step=1, limit=4
  $region2: #{_lambda_.4} parent=0 // loop_pre_header
    _
  $region3: #{_lambda_.4} parent=0 // loop_header
    %s9 = sphi 0, %s13
    %p10 = scmp.ge.s32.totalorder %s9, 4
    %s16 = sphi 0, %s35
    %s17 = sphi 0, %s31
    %s18 = sphi 0, %s27
    %s19 = sphi 0, %s16
    %s20 = sphi 0, %s17
    %s21 = sphi 0, %s18
    %s22 = sphi 0, %s19
    %s23 = sphi 0, %s20
    %s24 = sphi 0, %s21
    %s40 = sphi 0, %s42
    %s43 = sphi 0, %s40
    %s44 = sphi 0, %s43
    %s60 = sphi 0, %s44
    %s68 = sphi 0, %s70
    %s71 = sphi 0, %s68
    %s72 = sphi 0, %s71
    %s88 = sphi 0, %s72
    %s96 = sphi 0, %s98
    %s99 = sphi 0, %s96
    %s100 = sphi 0, %s99
    %s116 = sphi 0, %s100
    %s124 = sphi 0, %s126
    %s127 = sphi 0, %s124
    %s128 = sphi 0, %s127
    %s144 = sphi 0, %s128
  $region4: #{_lambda_.4} parent=0 // loop_header_branch
    %12 = sbr.rel (%p10) target = $region8
  $region5: #{_lambda_.4} parent=0 // loop_body
    %s14 = ssub.s32 %s9, 1
    %s15 = ssub.s32 %s9, 2
    %s25 = sadd.s32 1, %s18
    %p26 = scmp.ge.s32.totalorder %s25, 1
    %s27 = scalar_select %p26, 0, %s25
    %s28 = sadd.s32 1, %s17
    %s29 = scalar_select %p26, %s28, %s17
    %p30 = scmp.ge.s32.totalorder %s29, 1
    %s31 = scalar_select %p30, 0, %s29
    %s32 = sadd.s32 1, %s16
    %s33 = scalar_select %p30, %s32, %s16
    %p34 = scmp.ge.s32.totalorder %s33, 2
    %s35 = scalar_select %p34, 0, %s33
    %s36 = ssub.s32 %s16, %s35
    %s37 = ssub.s32 %s17, %s31
    %s38 = sor.u32 %s36, %s37
    %p39 = scmp.eq.s32.totalorder %s38, 0
    %s41 = sadd.s32 %s40, 1
    %s42 = scalar_select %p39, %s40, %s41
    %p45 = pneg %p39
    %p46 = scmp.eq.s32.totalorder %s9, 1
    %p47 = por %p45, %p46
    %p48 = scmp.ne.s32.totalorder %s40, %s43
    %p49 = scmp.eq.s32.totalorder %s9, 0
    %p50 = por %p48, %p49
    %p51 = scmp.ne.s32.totalorder %s40, %s43
    %p52 = scmp.eq.s32.totalorder %s14, 1
    %p53 = por %p51, %p52
    %p54 = scmp.ne.s32.totalorder %s43, %s44
    %p55 = scmp.eq.s32.totalorder %s14, 0
    %p56 = por %p54, %p55
    %p57 = scmp.ne.s32.totalorder %s43, %s44
    %p58 = scmp.eq.s32.totalorder %s15, 1
    %p59 = por %p57, %p58
    %p61 = scmp.ne.s32.totalorder %s44, %s60
    %p62 = scmp.eq.s32.totalorder %s15, 0
    %p63 = por %p61, %p62
    %s64 = ssub.s32 %s16, %s35
    %s65 = ssub.s32 %s18, %s27
    %s66 = sor.u32 %s64, %s65
    %p67 = scmp.eq.s32.totalorder %s66, 0
    %s69 = sadd.s32 %s68, 1
    %s70 = scalar_select %p67, %s68, %s69
    %p73 = pneg %p67
    %p74 = scmp.eq.s32.totalorder %s9, 1
    %p75 = por %p73, %p74
    %p76 = scmp.ne.s32.totalorder %s68, %s71
    %p77 = scmp.eq.s32.totalorder %s9, 0
    %p78 = por %p76, %p77
    %p79 = scmp.ne.s32.totalorder %s68, %s71
    %p80 = scmp.eq.s32.totalorder %s14, 1
    %p81 = por %p79, %p80
    %p82 = scmp.ne.s32.totalorder %s71, %s72
    %p83 = scmp.eq.s32.totalorder %s14, 0
    %p84 = por %p82, %p83
    %p85 = scmp.ne.s32.totalorder %s71, %s72
    %p86 = scmp.eq.s32.totalorder %s15, 1
    %p87 = por %p85, %p86
    %p89 = scmp.ne.s32.totalorder %s72, %s88
    %p90 = scmp.eq.s32.totalorder %s15, 0
    %p91 = por %p89, %p90
    %s92 = ssub.s32 %s16, %s35
    %s93 = ssub.s32 %s18, %s27
    %s94 = sor.u32 %s92, %s93
    %p95 = scmp.eq.s32.totalorder %s94, 0
    %s97 = sadd.s32 %s96, 1
    %s98 = scalar_select %p95, %s96, %s97
    %p101 = pneg %p95
    %p102 = scmp.eq.s32.totalorder %s9, 1
    %p103 = por %p101, %p102
    %p104 = scmp.ne.s32.totalorder %s96, %s99
    %p105 = scmp.eq.s32.totalorder %s9, 0
    %p106 = por %p104, %p105
    %p107 = scmp.ne.s32.totalorder %s96, %s99
    %p108 = scmp.eq.s32.totalorder %s14, 1
    %p109 = por %p107, %p108
    %p110 = scmp.ne.s32.totalorder %s99, %s100
    %p111 = scmp.eq.s32.totalorder %s14, 0
    %p112 = por %p110, %p111
    %p113 = scmp.ne.s32.totalorder %s99, %s100
    %p114 = scmp.eq.s32.totalorder %s15, 1
    %p115 = por %p113, %p114
    %p117 = scmp.ne.s32.totalorder %s100, %s116
    %p118 = scmp.eq.s32.totalorder %s15, 0
    %p119 = por %p117, %p118
    %s120 = ssub.s32 %s16, %s35
    %s121 = ssub.s32 %s17, %s31
    %s122 = sor.u32 %s120, %s121
    %p123 = scmp.eq.s32.totalorder %s122, 0
    %s125 = sadd.s32 %s124, 1
    %s126 = scalar_select %p123, %s124, %s125
    %p129 = pneg %p123
    %p130 = scmp.eq.s32.totalorder %s9, 1
    %p131 = por %p129, %p130
    %p132 = scmp.ne.s32.totalorder %s124, %s127
    %p133 = scmp.eq.s32.totalorder %s9, 0
    %p134 = por %p132, %p133
    %p135 = scmp.ne.s32.totalorder %s124, %s127
    %p136 = scmp.eq.s32.totalorder %s14, 1
    %p137 = por %p135, %p136
    %p138 = scmp.ne.s32.totalorder %s127, %s128
    %p139 = scmp.eq.s32.totalorder %s14, 0
    %p140 = por %p138, %p139
    %p141 = scmp.ne.s32.totalorder %s127, %s128
    %p142 = scmp.eq.s32.totalorder %s15, 1
    %p143 = por %p141, %p142
    %p145 = scmp.ne.s32.totalorder %s128, %s144
    %p146 = scmp.eq.s32.totalorder %s15, 0
    %p147 = por %p145, %p146
    %p148 = scmp.le.s32.totalorder 1, %s9
    %p149 = scmp.lt.s32.totalorder %s9, 3
    %p150 = pnand %p148, %p149
    %p151 = pneg %p150
    // Predicated region
    $region9: #{_lambda_.4} parent=5 // pred_check
      _
    $region10: #{_lambda_.4} parent=5 // pred_check_branch
      %153 = sbr.rel (%p150) target = $region12
    $region11: #{_lambda_.4} parent=5 // pred_region
      %s154 = ssub.s32 %s9, 1
    $region12: #{_lambda_.4} parent=5 // pred_fallthru
      _
    %p155 = scmp.lt.s32.totalorder %s9, 2
    // Predicated region
    $region13: #{_lambda_.4} parent=5 // pred_check
      %p156 = pneg %p155
    $region14: #{_lambda_.4} parent=5 // pred_check_branch
      %158 = sbr.rel (%p156) target = $region16
    $region15: #{_lambda_.4} parent=5 // pred_region
      // Predicated region
      $region17: #{_lambda_.4} parent=15 // pred_check
        %p159 = pneg %p50
      $region18: #{_lambda_.4} parent=15 // pred_check_branch
        %161 = sbr.rel (%p159) target = $region20
      $region19: #{_lambda_.4} parent=15 // pred_region
        %p162 = scmp.lt.s32.totalorder %s16, 1
        %s163 = scalar_select %p162, %s16, 1
        %p164 = scmp.lt.s32.totalorder %s17, 0
        %s165 = scalar_select %p164, %s17, 0
        %s166 = smul.addr %s163, 4
        %s167 = sadd.s32 %s165, %s166
        %s168 = smul.addr %s167, 8
        %s169 = scalar_lea.vmem %s0, %s168
      $region20: #{_lambda_.4} parent=15 // pred_fallthru
        _
      // Predicated region
      $region21: #{_lambda_.4} parent=15 // pred_check
        %p170 = pneg %p78
      $region22: #{_lambda_.4} parent=15 // pred_check_branch
        %172 = sbr.rel (%p170) target = $region24
      $region23: #{_lambda_.4} parent=15 // pred_region
        %p173 = scmp.lt.s32.totalorder %s16, 1
        %s174 = scalar_select %p173, %s16, 1
        %p175 = scmp.lt.s32.totalorder %s18, 0
        %s176 = scalar_select %p175, %s18, 0
        %s177 = smul.addr %s174, 4
        %s178 = sadd.s32 %s176, %s177
        %s179 = smul.addr %s178, 8
        %s180 = scalar_lea.vmem %s1, %s179
      $region24: #{_lambda_.4} parent=15 // pred_fallthru
        _
      // Predicated region
      $region25: #{_lambda_.4} parent=15 // pred_check
        %p181 = pneg %p106
      $region26: #{_lambda_.4} parent=15 // pred_check_branch
        %183 = sbr.rel (%p181) target = $region28
      $region27: #{_lambda_.4} parent=15 // pred_region
        %p184 = scmp.lt.s32.totalorder %s16, 1
        %s185 = scalar_select %p184, %s16, 1
        %p186 = scmp.lt.s32.totalorder %s18, 0
        %s187 = scalar_select %p186, %s18, 0
        %s188 = smul.addr %s185, 4
        %s189 = sadd.s32 %s187, %s188
        %s190 = smul.addr %s189, 8
        %s191 = scalar_lea.vmem %s2, %s190
      $region28: #{_lambda_.4} parent=15 // pred_fallthru
        _
    $region16: #{_lambda_.4} parent=5 // pred_fallthru
      _
    %p192 = scmp.le.s32.totalorder 1, %s9
    %p193 = scmp.lt.s32.totalorder %s9, 3
    %p194 = pnand %p192, %p193
    %p195 = pneg %p194
    // Predicated region
    $region29: #{_lambda_.4} parent=5 // pred_check
      _
    $region30: #{_lambda_.4} parent=5 // pred_check_branch
      %197 = sbr.rel (%p194) target = $region32
    $region31: #{_lambda_.4} parent=5 // pred_region
      %s198 = ssub.s32 %s9, 1
      %p199 = scmp.lt.s32.totalorder %s19, 1
      %s200 = scalar_select %p199, %s19, 1
      %p201 = scmp.lt.s32.totalorder %s20, 0
      %s202 = scalar_select %p201, %s20, 0
      %s203 = smul.addr %s200, 4
      %s204 = sadd.s32 %s202, %s203
      %s205 = smul.addr %s204, 8
      %s206 = scalar_lea.vmem %s0, %s205
      %p207 = pneg %p56
      %p208 = pneg %p53
      %p209 = scmp.lt.s32.totalorder %s19, 1
      %s210 = scalar_select %p209, %s19, 1
      %p211 = scmp.lt.s32.totalorder %s21, 0
      %s212 = scalar_select %p211, %s21, 0
      %s213 = smul.addr %s210, 4
      %s214 = sadd.s32 %s212, %s213
      %s215 = smul.addr %s214, 8
      %s216 = scalar_lea.vmem %s1, %s215
      %p217 = pneg %p84
      %p218 = pneg %p81
      %p219 = scmp.lt.s32.totalorder %s19, 1
      %s220 = scalar_select %p219, %s19, 1
      %p221 = scmp.lt.s32.totalorder %s21, 0
      %s222 = scalar_select %p221, %s21, 0
      %s223 = smul.addr %s220, 4
      %s224 = sadd.s32 %s222, %s223
      %s225 = smul.addr %s224, 8
      %s226 = scalar_lea.vmem %s2, %s225
      %p227 = pneg %p112
      %p228 = pneg %p109
      %p229 = pneg %p140
      %p230 = pneg %p137
      %p231 = scmp.lt.s32.totalorder %s19, 1
      %s232 = scalar_select %p231, %s19, 1
      %p233 = scmp.lt.s32.totalorder %s20, 0
      %s234 = scalar_select %p233, %s20, 0
      %s235 = smul.addr %s232, 4
      %s236 = sadd.s32 %s234, %s235
      %s237 = smul.addr %s236, 8
      %s238 = scalar_lea.vmem %s3, %s237
      %p239 = scmp.lt.s32.totalorder %s19, 1
      %s240 = scalar_select %p239, %s19, 1
      %p241 = scmp.lt.s32.totalorder %s20, 0
      %s242 = scalar_select %p241, %s20, 0
      %s243 = smul.addr %s240, 4
      %s244 = sadd.s32 %s242, %s243
      %s245 = smul.addr %s244, 8
      %s246 = scalar_lea.vmem %s0, %s245
      %p247 = scmp.lt.s32.totalorder %s19, 1
      %s248 = scalar_select %p247, %s19, 1
      %p249 = scmp.lt.s32.totalorder %s21, 0
      %s250 = scalar_select %p249, %s21, 0
      %s251 = smul.addr %s248, 4
      %s252 = sadd.s32 %s250, %s251
      %s253 = smul.addr %s252, 8
      %s254 = scalar_lea.vmem %s1, %s253
      %p255 = scmp.lt.s32.totalorder %s19, 1
      %s256 = scalar_select %p255, %s19, 1
      %p257 = scmp.lt.s32.totalorder %s21, 0
      %s258 = scalar_select %p257, %s21, 0
      %s259 = smul.addr %s256, 4
      %s260 = sadd.s32 %s258, %s259
      %s261 = smul.addr %s260, 8
      %s262 = scalar_lea.vmem %s2, %s261
      %p263 = scmp.lt.s32.totalorder %s19, 1
      %s264 = scalar_select %p263, %s19, 1
      %p265 = scmp.lt.s32.totalorder %s20, 0
      %s266 = scalar_select %p265, %s20, 0
      %s267 = smul.addr %s264, 4
      %s268 = sadd.s32 %s266, %s267
      %s269 = smul.addr %s268, 8
      %s270 = scalar_lea.vmem %s3, %s269
      %p272 = scmp.eq.s32.totalorder %s21, 0
      // Predicated region
      $region33: #{_lambda_.4} parent=31 // pred_check
        %p273 = pneg %p272
      $region34: #{_lambda_.4} parent=31 // pred_check_branch
        %275 = sbr.rel (%p273) target = $region36
      $region35: #{_lambda_.4} parent=31 // pred_region
        %vm276 = vcmask 7168
        %277 = vst.msk [vmem:[#allocation2] sm:$0xff] %vm276, -inf
        %278 = vst.msk [vmem:[#allocation2 + $0x8] sm:$0xff] %vm276, -inf
        %279 = vst.msk [vmem:[#allocation2 + $0x10] sm:$0xff] %vm276, -inf
        %280 = vst.msk [vmem:[#allocation2 + $0x18] sm:$0xff] %vm276, -inf
        %281 = vst.msk [vmem:[#allocation3] sm:$0xff] %vm276, 0.0
        %282 = vst.msk [vmem:[#allocation3 + $0x8] sm:$0xff] %vm276, 0.0
        %283 = vst.msk [vmem:[#allocation3 + $0x10] sm:$0xff] %vm276, 0.0
        %284 = vst.msk [vmem:[#allocation3 + $0x18] sm:$0xff] %vm276, 0.0
        %vm285 = vcmask 64512
        %286 = vst.msk [vmem:[#allocation4] sm:$0xff] %vm285, 0.0
        %287 = vst.msk [vmem:[#allocation4 + $0x8] sm:$0xff] %vm285, 0.0
        %288 = vst.msk [vmem:[#allocation4 + $0x10] sm:$0xff] %vm285, 0.0
        %289 = vst.msk [vmem:[#allocation4 + $0x18] sm:$0xff] %vm285, 0.0
      $region36: #{_lambda_.4} parent=31 // pred_fallthru
        _
      %v290 = vld [vmem:[%s246] sm:$0xff]
      %v291 = vld [vmem:[%s246 + $0x8] sm:$0xff]
      %v292 = vld [vmem:[%s246 + $0x10] sm:$0xff]
      %v293 = vld [vmem:[%s246 + $0x18] sm:$0xff]
      %v294 = vmul.f32 %v290, 0.35355338
      %v295 = vmul.f32 %v291, 0.35355338
      %v296 = vmul.f32 %v292, 0.35355338
      %v297 = vmul.f32 %v293, 0.35355338
      %v298 = vpack.c.bf16 %v294, %v294
      %v299 = vpack.c.bf16 %v295, %v295
      %v300 = vpack.c.bf16 %v296, %v296
      %v301 = vpack.c.bf16 %v297, %v297
      %v302 = vld [vmem:[%s254] sm:$0xff]
      %v303 = vld [vmem:[%s254 + $0x8] sm:$0xff]
      %v304 = vld [vmem:[%s254 + $0x10] sm:$0xff]
      %v305 = vld [vmem:[%s254 + $0x18] sm:$0xff]
      %v306 = vpack.c.bf16 %v302, %v302
      %v307 = vpack.c.bf16 %v303, %v303
      %v308 = vpack.c.bf16 %v304, %v304
      %v309 = vpack.c.bf16 %v305, %v305
      %v310 = vld [vmem:[%s262] sm:$0xff]
      %v311 = vld [vmem:[%s262 + $0x8] sm:$0xff]
      %v312 = vld [vmem:[%s262 + $0x10] sm:$0xff]
      %v313 = vld [vmem:[%s262 + $0x18] sm:$0xff]
      %v314 = vpack.c.bf16 %v310, %v310
      %v315 = vpack.c.bf16 %v311, %v311
      %v316 = vpack.c.bf16 %v312, %v312
      %v317 = vpack.c.bf16 %v313, %v313
      %vm318 = vcmask 64512
      %v320 = vsel %vm318, %v298, 0
      %v323 = vsel %vm318, %v306, 0
      %325 = vmatpush.bf16.xpose.msra.mxu0 0
      %326 = vmatpush.bf16.xpose.msra.mxu0 0
      %327 = vmatpush.bf16.xpose.msra.mxu0 0
      %328 = vmatpush.bf16.xpose.msra.mxu0 0
      %329 = vmatpush.bf16.xpose.msra.mxu0 0
      %330 = vmatpush.bf16.xpose.msra.mxu0 0
      %331 = vmatpush.bf16.xpose.msra.mxu0 0
      %332 = vmatpush.bf16.xpose.msra.mxu0 %v323
      %333 = vmatmul.bf16.gmra.mxu0 %v320
      %v334 = vpop.f32.mrf.mxu0
      %v335 = vadd.f32 0.0, %v334
      %v336 = vpop.f32.mrf.mxu0
      %337 = vdwg.mxu0
      %v339 = vsel %vm318, %v299, 0
      %v342 = vsel %vm318, %v307, 0
      %344 = vmatpush.bf16.xpose.msra.mxu0 0
      %345 = vmatpush.bf16.xpose.msra.mxu0 0
      %346 = vmatpush.bf16.xpose.msra.mxu0 0
      %347 = vmatpush.bf16.xpose.msra.mxu0 0
      %348 = vmatpush.bf16.xpose.msra.mxu0 0
      %349 = vmatpush.bf16.xpose.msra.mxu0 0
      %350 = vmatpush.bf16.xpose.msra.mxu0 0
      %351 = vmatpush.bf16.xpose.msra.mxu0 %v342
      %352 = vmatmul.bf16.gmra.mxu0 %v339
      %v353 = vpop.f32.mrf.mxu0
      %v354 = vadd.f32 0.0, %v353
      %v355 = vpop.f32.mrf.mxu0
      %356 = vdwg.mxu0
      %v358 = vsel %vm318, %v300, 0
      %v361 = vsel %vm318, %v308, 0
      %363 = vmatpush.bf16.xpose.msra.mxu0 0
      %364 = vmatpush.bf16.xpose.msra.mxu0 0
      %365 = vmatpush.bf16.xpose.msra.mxu0 0
      %366 = vmatpush.bf16.xpose.msra.mxu0 0
      %367 = vmatpush.bf16.xpose.msra.mxu0 0
      %368 = vmatpush.bf16.xpose.msra.mxu0 0
      %369 = vmatpush.bf16.xpose.msra.mxu0 0
      %370 = vmatpush.bf16.xpose.msra.mxu0 %v361
      %371 = vmatmul.bf16.gmra.mxu0 %v358
      %v372 = vpop.f32.mrf.mxu0
      %v373 = vadd.f32 0.0, %v372
      %v374 = vpop.f32.mrf.mxu0
      %375 = vdwg.mxu0
      %v377 = vsel %vm318, %v301, 0
      %v380 = vsel %vm318, %v309, 0
      %382 = vmatpush.bf16.xpose.msra.mxu0 0
      %383 = vmatpush.bf16.xpose.msra.mxu0 0
      %384 = vmatpush.bf16.xpose.msra.mxu0 0
      %385 = vmatpush.bf16.xpose.msra.mxu0 0
      %386 = vmatpush.bf16.xpose.msra.mxu0 0
      %387 = vmatpush.bf16.xpose.msra.mxu0 0
      %388 = vmatpush.bf16.xpose.msra.mxu0 0
      %389 = vmatpush.bf16.xpose.msra.mxu0 %v380
      %390 = vmatmul.bf16.gmra.mxu0 %v377
      %v391 = vpop.f32.mrf.mxu0
      %v392 = vadd.f32 0.0, %v391
      %v393 = vpop.f32.mrf.mxu0
      %394 = vdwg.mxu0
      %v395 = vld [vmem:[#allocation2] sm:$0xff]
      %v396 = vld [vmem:[#allocation2 + $0x8] sm:$0xff]
      %v397 = vld [vmem:[#allocation2 + $0x10] sm:$0xff]
      %v398 = vld [vmem:[#allocation2 + $0x18] sm:$0xff]
      %v399 = vsel %vm318, %v335, -inf
      %400 = vmax.xlane.f32.xlu0 %v399
      %v401 = vpop.xlane.xlu0 %400
      %v402 = vsel %vm318, %v354, -inf
      %403 = vmax.xlane.f32.xlu0 %v402
      %v404 = vpop.xlane.xlu0 %403
      %v405 = vsel %vm318, %v373, -inf
      %406 = vmax.xlane.f32.xlu0 %v405
      %v407 = vpop.xlane.xlu0 %406
      %v408 = vsel %vm318, %v392, -inf
      %409 = vmax.xlane.f32.xlu0 %v408
      %v410 = vpop.xlane.xlu0 %409
      %v411 = vmax.f32 %v395, %v401
      %v412 = vmax.f32 %v396, %v404
      %v413 = vmax.f32 %v397, %v407
      %v414 = vmax.f32 %v398, %v410
      %v415 = vsub.f32 %v395, %v411
      %v416 = vsub.f32 %v396, %v412
      %v417 = vsub.f32 %v397, %v413
      %v418 = vsub.f32 %v398, %v414
      %v419 = vmul.f32 %v415, 1.442695
      %v420 = vpow.pop %v419
      %v421 = vmul.f32 %v416, 1.442695
      %v422 = vpow.pop %v421
      %v423 = vmul.f32 %v417, 1.442695
      %v424 = vpow.pop %v423
      %v425 = vmul.f32 %v418, 1.442695
      %v426 = vpow.pop %v425
      %428 = vset.pattern.permute.xlu0 0
      %429 = vperm.xlu0 %428, %v411
      %v430 = vpop.permute.xlu0 %429
      %433 = vset.pattern.permute.xlu0 0
      %434 = vperm.xlu0 %433, %v412
      %v435 = vpop.permute.xlu0 %434
      %438 = vset.pattern.permute.xlu0 0
      %439 = vperm.xlu0 %438, %v413
      %v440 = vpop.permute.xlu0 %439
      %443 = vset.pattern.permute.xlu0 0
      %444 = vperm.xlu0 %443, %v414
      %v445 = vpop.permute.xlu0 %444
      %v447 = vsub.f32 %v335, %v430
      %v448 = vsub.f32 %v354, %v435
      %v449 = vsub.f32 %v373, %v440
      %v450 = vsub.f32 %v392, %v445
      %v451 = vmul.f32 %v447, 1.442695
      %v452 = vpow.pop %v451
      %v453 = vmul.f32 %v448, 1.442695
      %v454 = vpow.pop %v453
      %v455 = vmul.f32 %v449, 1.442695
      %v456 = vpow.pop %v455
      %v457 = vmul.f32 %v450, 1.442695
      %v458 = vpow.pop %v457
      %v459 = vld [vmem:[#allocation3] sm:$0xff]
      %v460 = vld [vmem:[#allocation3 + $0x8] sm:$0xff]
      %v461 = vld [vmem:[#allocation3 + $0x10] sm:$0xff]
      %v462 = vld [vmem:[#allocation3 + $0x18] sm:$0xff]
      %v463 = vmul.f32 %v420, %v459
      %v464 = vmul.f32 %v422, %v460
      %v465 = vmul.f32 %v424, %v461
      %v466 = vmul.f32 %v426, %v462
      %v467 = vsel %vm318, %v452, 0.0
      %468 = vadd.xlane.f32.xlu0 %v467
      %v469 = vpop.xlane.xlu0 %468
      %v470 = vsel %vm318, %v454, 0.0
      %471 = vadd.xlane.f32.xlu0 %v470
      %v472 = vpop.xlane.xlu0 %471
      %v473 = vsel %vm318, %v456, 0.0
      %474 = vadd.xlane.f32.xlu0 %v473
      %v475 = vpop.xlane.xlu0 %474
      %v476 = vsel %vm318, %v458, 0.0
      %477 = vadd.xlane.f32.xlu0 %v476
      %v478 = vpop.xlane.xlu0 %477
      %v479 = vadd.f32 %v463, %v469
      %v480 = vadd.f32 %v464, %v472
      %v481 = vadd.f32 %v465, %v475
      %v482 = vadd.f32 %v466, %v478
      %vm483 = vcmask 7168
      %484 = vst.msk [vmem:[#allocation3] sm:$0xff] %vm483, %v479
      %485 = vst.msk [vmem:[#allocation3 + $0x8] sm:$0xff] %vm483, %v480
      %486 = vst.msk [vmem:[#allocation3 + $0x10] sm:$0xff] %vm483, %v481
      %487 = vst.msk [vmem:[#allocation3 + $0x18] sm:$0xff] %vm483, %v482
      %v488 = vld [vmem:[#allocation4] sm:$0xff]
      %v489 = vld [vmem:[#allocation4 + $0x8] sm:$0xff]
      %v490 = vld [vmem:[#allocation4 + $0x10] sm:$0xff]
      %v491 = vld [vmem:[#allocation4 + $0x18] sm:$0xff]
      %493 = vset.pattern.permute.xlu0 0
      %494 = vperm.xlu0 %493, %v420
      %v495 = vpop.permute.xlu0 %494
      %498 = vset.pattern.permute.xlu0 0
      %499 = vperm.xlu0 %498, %v422
      %v500 = vpop.permute.xlu0 %499
      %503 = vset.pattern.permute.xlu0 0
      %504 = vperm.xlu0 %503, %v424
      %v505 = vpop.permute.xlu0 %504
      %508 = vset.pattern.permute.xlu0 0
      %509 = vperm.xlu0 %508, %v426
      %v510 = vpop.permute.xlu0 %509
      %v512 = vmul.f32 %v495, %v488
      %v513 = vmul.f32 %v500, %v489
      %v514 = vmul.f32 %v505, %v490
      %v515 = vmul.f32 %v510, %v491
      %v516 = vpack.c.bf16 %v452, %v452
      %v517 = vpack.c.bf16 %v454, %v454
      %v518 = vpack.c.bf16 %v456, %v456
      %v519 = vpack.c.bf16 %v458, %v458
      %v521 = vsel %vm318, %v516, 0
      %vm523 = vcmask 1043456
      %v525 = vsel %vm523, %v314, 0
      %527 = vmatpush.bf16.msra.mxu0 0
      %528 = vmatpush.bf16.msra.mxu0 0
      %529 = vmatpush.bf16.msra.mxu0 0
      %530 = vmatpush.bf16.msra.mxu0 0
      %531 = vmatpush.bf16.msra.mxu0 0
      %532 = vmatpush.bf16.msra.mxu0 0
      %533 = vmatpush.bf16.msra.mxu0 0
      %534 = vmatpush.bf16.msra.mxu0 %v525
      %535 = vmatmul.bf16.gmra.mxu0 %v521
      %v536 = vpop.f32.mrf.mxu0
      %v537 = vadd.f32 0.0, %v536
      %v538 = vpop.f32.mrf.mxu0
      %539 = vdwg.mxu0
      %v541 = vsel %vm318, %v517, 0
      %v544 = vsel %vm523, %v315, 0
      %546 = vmatpush.bf16.msra.mxu0 0
      %547 = vmatpush.bf16.msra.mxu0 0
      %548 = vmatpush.bf16.msra.mxu0 0
      %549 = vmatpush.bf16.msra.mxu0 0
      %550 = vmatpush.bf16.msra.mxu0 0
      %551 = vmatpush.bf16.msra.mxu0 0
      %552 = vmatpush.bf16.msra.mxu0 0
      %553 = vmatpush.bf16.msra.mxu0 %v544
      %554 = vmatmul.bf16.gmra.mxu0 %v541
      %v555 = vpop.f32.mrf.mxu0
      %v556 = vadd.f32 0.0, %v555
      %v557 = vpop.f32.mrf.mxu0
      %558 = vdwg.mxu0
      %v560 = vsel %vm318, %v518, 0
      %v563 = vsel %vm523, %v316, 0
      %565 = vmatpush.bf16.msra.mxu0 0
      %566 = vmatpush.bf16.msra.mxu0 0
      %567 = vmatpush.bf16.msra.mxu0 0
      %568 = vmatpush.bf16.msra.mxu0 0
      %569 = vmatpush.bf16.msra.mxu0 0
      %570 = vmatpush.bf16.msra.mxu0 0
      %571 = vmatpush.bf16.msra.mxu0 0
      %572 = vmatpush.bf16.msra.mxu0 %v563
      %573 = vmatmul.bf16.gmra.mxu0 %v560
      %v574 = vpop.f32.mrf.mxu0
      %v575 = vadd.f32 0.0, %v574
      %v576 = vpop.f32.mrf.mxu0
      %577 = vdwg.mxu0
      %v579 = vsel %vm318, %v519, 0
      %v582 = vsel %vm523, %v317, 0
      %584 = vmatpush.bf16.msra.mxu0 0
      %585 = vmatpush.bf16.msra.mxu0 0
      %586 = vmatpush.bf16.msra.mxu0 0
      %587 = vmatpush.bf16.msra.mxu0 0
      %588 = vmatpush.bf16.msra.mxu0 0
      %589 = vmatpush.bf16.msra.mxu0 0
      %590 = vmatpush.bf16.msra.mxu0 0
      %591 = vmatpush.bf16.msra.mxu0 %v582
      %592 = vmatmul.bf16.gmra.mxu0 %v579
      %v593 = vpop.f32.mrf.mxu0
      %v594 = vadd.f32 0.0, %v593
      %v595 = vpop.f32.mrf.mxu0
      %596 = vdwg.mxu0
      %v597 = vadd.f32 %v512, %v537
      %v598 = vadd.f32 %v513, %v556
      %v599 = vadd.f32 %v514, %v575
      %v600 = vadd.f32 %v515, %v594
      %601 = vst.msk [vmem:[#allocation4] sm:$0xff] %vm318, %v597
      %602 = vst.msk [vmem:[#allocation4 + $0x8] sm:$0xff] %vm318, %v598
      %603 = vst.msk [vmem:[#allocation4 + $0x10] sm:$0xff] %vm318, %v599
      %604 = vst.msk [vmem:[#allocation4 + $0x18] sm:$0xff] %vm318, %v600
      %605 = vst.msk [vmem:[#allocation2] sm:$0xff] %vm483, %v411
      %606 = vst.msk [vmem:[#allocation2 + $0x8] sm:$0xff] %vm483, %v412
      %607 = vst.msk [vmem:[#allocation2 + $0x10] sm:$0xff] %vm483, %v413
      %608 = vst.msk [vmem:[#allocation2 + $0x18] sm:$0xff] %vm483, %v414
      // Predicated region
      $region37: #{_lambda_.4} parent=31 // pred_check
        %p609 = pneg %p272
      $region38: #{_lambda_.4} parent=31 // pred_check_branch
        %611 = sbr.rel (%p609) target = $region40
      $region39: #{_lambda_.4} parent=31 // pred_region
        %v612 = vld [vmem:[#allocation3] sm:$0xff]
        %v613 = vld [vmem:[#allocation3 + $0x8] sm:$0xff]
        %v614 = vld [vmem:[#allocation3 + $0x10] sm:$0xff]
        %v615 = vld [vmem:[#allocation3 + $0x18] sm:$0xff]
        %v616 = vrcp.pop %v612
        %v617 = vrcp.pop %v613
        %v618 = vrcp.pop %v614
        %v619 = vrcp.pop %v615
        %v620 = vld [vmem:[#allocation4] sm:$0xff]
        %v621 = vld [vmem:[#allocation4 + $0x8] sm:$0xff]
        %v622 = vld [vmem:[#allocation4 + $0x10] sm:$0xff]
        %v623 = vld [vmem:[#allocation4 + $0x18] sm:$0xff]
        %625 = vset.pattern.permute.xlu0 0
        %626 = vperm.xlu0 %625, %v616
        %v627 = vpop.permute.xlu0 %626
        %630 = vset.pattern.permute.xlu0 0
        %631 = vperm.xlu0 %630, %v617
        %v632 = vpop.permute.xlu0 %631
        %635 = vset.pattern.permute.xlu0 0
        %636 = vperm.xlu0 %635, %v618
        %v637 = vpop.permute.xlu0 %636
        %640 = vset.pattern.permute.xlu0 0
        %641 = vperm.xlu0 %640, %v619
        %v642 = vpop.permute.xlu0 %641
        %v644 = vmul.f32 %v620, %v627
        %v645 = vmul.f32 %v621, %v632
        %v646 = vmul.f32 %v622, %v637
        %v647 = vmul.f32 %v623, %v642
        %648 = vst.msk [vmem:[%s270] sm:$0xff] %vm318, %v644
        %649 = vst.msk [vmem:[%s270 + $0x8] sm:$0xff] %vm318, %v645
        %650 = vst.msk [vmem:[%s270 + $0x10] sm:$0xff] %vm318, %v646
        %651 = vst.msk [vmem:[%s270 + $0x18] sm:$0xff] %vm318, %v647
      $region40: #{_lambda_.4} parent=31 // pred_fallthru
        _
      %p652 = scmp.lt.s32.totalorder %s19, 1
      %s653 = scalar_select %p652, %s19, 1
      %p654 = scmp.lt.s32.totalorder %s20, 0
      %s655 = scalar_select %p654, %s20, 0
      %s656 = smul.addr %s653, 4
      %s657 = sadd.s32 %s655, %s656
      %s658 = smul.addr %s657, 8
      %s659 = scalar_lea.vmem %s3, %s658
      // Predicated region
      $region41: #{_lambda_.4} parent=31 // pred_check
        %p660 = pneg %p137
      $region42: #{_lambda_.4} parent=31 // pred_check_branch
        %662 = sbr.rel (%p660) target = $region44
      $region43: #{_lambda_.4} parent=31 // pred_region
        _
      $region44: #{_lambda_.4} parent=31 // pred_fallthru
        _
    $region32: #{_lambda_.4} parent=5 // pred_fallthru
      _
    %p663 = scmp.le.s32.totalorder 2, %s9
    // Predicated region
    $region45: #{_lambda_.4} parent=5 // pred_check
      %p664 = pneg %p663
    $region46: #{_lambda_.4} parent=5 // pred_check_branch
      %666 = sbr.rel (%p664) target = $region48
    $region47: #{_lambda_.4} parent=5 // pred_region
      %s667 = ssub.s32 %s9, 2
      // Predicated region
      $region49: #{_lambda_.4} parent=47 // pred_check
        %p668 = pneg %p143
      $region50: #{_lambda_.4} parent=47 // pred_check_branch
        %670 = sbr.rel (%p668) target = $region52
      $region51: #{_lambda_.4} parent=47 // pred_region
        %p671 = scmp.lt.s32.totalorder %s22, 1
        %s672 = scalar_select %p671, %s22, 1
        %p673 = scmp.lt.s32.totalorder %s23, 0
        %s674 = scalar_select %p673, %s23, 0
        %s675 = smul.addr %s672, 4
        %s676 = sadd.s32 %s674, %s675
        %s677 = smul.addr %s676, 8
        %s678 = scalar_lea.vmem %s3, %s677
      $region52: #{_lambda_.4} parent=47 // pred_fallthru
        _
    $region48: #{_lambda_.4} parent=5 // pred_fallthru
      _
  $region6: #{_lambda_.4} parent=0 // loop_footer
    %s13 = sadd.s32 1, %s9
  $region7: #{_lambda_.4} parent=0 // loop_footer_branch
    %8 = sbr.rel target = $region3
  $region8: #{_lambda_.4} parent=0 // loop_exit
    _

</llo_original>
